<compile_context>
chip_gen: v5e
topology: v5e:2x2
jax: 0.10.0
libtpu: 0.0.40
codegen_flags: <defaults>
</compile_context>

<pallas_src>
import functools

import jax
import jax.numpy as jnp
from jax import lax
from jax.experimental import pallas as pl
from jax.experimental.pallas import tpu as pltpu

EPS = 1e-5
_LANE = 128
_NEG_INF = -1e30


def _round_up(v, m):
    return (v + m - 1) // m * m


def _cdiv(a, b):
    return -(-a // b)


def _detect_vmem_capacity_bytes():
    """Physical VMEM per TensorCore (64 MiB on v7x, 128 MiB on v4/v5e/v6e)."""
    try:
        cap = int(pltpu.get_tpu_info().vmem_capacity_bytes)
        if cap > 0:
            return cap
    except Exception:
        pass
    try:
        kind = jax.devices()[0].device_kind.lower()
        if "v7" in kind:
            return 64 << 20
        return 128 << 20
    except Exception:
        return 64 << 20


# ----------------------------------------------------------------------------- kernel
def dignn_kernel(
    adj_ref, x_ref,
    wA_ref, bA_ref,                 # mlpA: Linear(num_nodes, H), 0.5-residual folded
    wX_ref, bX_ref,                 # mlpX: Linear(in_channels, H), 0.5-residual folded
    w0_ref, b0_ref,                 # W.lins[0]: Linear(2H, 2H) (rows 2x to undo 0.5)
    w1_ref, b1_ref,                 # W.lins[1] with W.bns[0] folded in
    fc1w_ref, fc1b_ref,             # fc1: Linear(H, H)
    fc2w_ref, fc2b_ref,             # fc2 with bn1∘bn2 folded in, lane-padded
    out_ref,
    xa_acc, hcat_buf,
):
    bf16 = jnp.bfloat16
    f32 = jnp.float32
    k = pl.program_id(1)
    nk = pl.num_programs(1)
    H = xa_acc.shape[-1]

    @pl.when(k == 0)
    def _():
        xa_acc[...] = jnp.zeros_like(xa_acc)

    # ---- streamed reduction over adjacency columns (dominant HBM stream) ----
    xa_acc[...] += jnp.dot(adj_ref[...], wA_ref[...], preferred_element_type=f32)

    # ---- epilogue on the last reduction step only ----
    @pl.when(k == nk - 1)
    def _():
        xA = xa_acc[...] + bA_ref[...]
        xX = jnp.dot(x_ref[...], wX_ref[...], preferred_element_type=f32) + bX_ref[...]

        # W MLP (num_layers=2): lin0 -> relu -> bn0(folded) -> lin1, outer relu.
        # concat([xA, xX]) realised via a VMEM scratch so lin0 is one K=2H dot.
        hcat_buf[:, :H] = xA.astype(bf16)
        hcat_buf[:, H:] = xX.astype(bf16)
        h = jnp.dot(hcat_buf[...], w0_ref[...], preferred_element_type=f32) + b0_ref[...]
        h = jnp.maximum(h, 0.0)
        h = jnp.dot(h.astype(bf16), w1_ref[...], preferred_element_type=f32) + b1_ref[...]
        h = jnp.maximum(h, 0.0)
        # residual (0.5 scale already folded into wA/bA/wX/bX at prep time)
        h = h + xA + xX

        # trunk: fc1 -> relu -> bn1(folded) -> model(identity) -> bn2(folded) -> fc2
        h = jnp.dot(h.astype(bf16), fc1w_ref[...], preferred_element_type=f32) + fc1b_ref[...]
        h = jnp.maximum(h, 0.0)
        logits = (jnp.dot(h.astype(bf16), fc2w_ref[...], preferred_element_type=f32)
                  + fc2b_ref[...])              # padded columns get bias ~ -inf

        # log_softmax over features (padded columns contribute exp(...) = 0)
        mx = jnp.max(logits, axis=-1, keepdims=True)
        sh = logits - mx
        lse = jnp.log(jnp.sum(jnp.exp(sh), axis=-1, keepdims=True))
        out_ref[...] = sh - lse


# ----------------------------------------------------------------------------- wrapper
def dignn_forward(adj, x, prepared, out_channels, *, tm=256, tk=1024,
                  vmem_budget_bytes=None):
    """adj: [N, N] dense adjacency, x: [N, C]; `prepared` = prepare_params(raw)."""
    N, N2 = adj.shape
    assert N == N2
    C = x.shape[1]
    H = prepared["wA"].shape[1]
    TWO_H = prepared["w0"].shape[0]
    OUT_PAD = prepared["fc2w"].shape[1]

    vmem_cap = _detect_vmem_capacity_bytes()
    if vmem_budget_bytes is None:
        vmem_budget_bytes = (vmem_cap * 3) // 4   # ~96 MiB on 128 MiB parts, ~48 MiB on v7x

    ordered = [prepared[key] for key in (
        "bA", "wX", "bX", "w0", "b0", "w1", "b1", "fc1w", "fc1b", "fc2w", "fc2b")]
    params_bytes = sum(int(p.size) * p.dtype.itemsize for p in ordered)

    adj_isz = 2  # bf16 adjacency stream (0/1 -> lossless)

    # --- tile selection: tm >= 128 / multiple of 16; k-tiling decouples VMEM from N ---
    tm = max(128, (int(tm) // 16) * 16)
    tk = max(128, (int(tk) // 128) * 128)
    Nk128 = _round_up(N, 128)
    tk = min(tk, Nk128)

    def vmem_need(tm_, tk_):
        need = 2 * (tm_ * tk_ * adj_isz + tm_ * C * 2 + tk_ * H * 2)  # dbl-buffered streams
        need += 2 * tm_ * OUT_PAD * 4                                 # dbl-buffered f32 out
        need += tm_ * H * 4 + tm_ * TWO_H * 2                         # scratch acc + hcat
        need += 2 * params_bytes                                      # resident weights
        need += 6 * tm_ * max(TWO_H, OUT_PAD) * 4                     # live f32 temps
        return need

    # shrink the reduction tile first; tm never drops below 128 (MXU-row guardrail)
    while vmem_need(tm, tk) > vmem_budget_bytes and tk > 128:
        tk = max(128, ((tk // 2) // 128) * 128)
    while vmem_need(tm, tk) > vmem_budget_bytes and tm > 128:
        tm = max(128, ((tm // 2) // 16) * 16)

    # balance k tiles so zero-padding waste stays small
    kt = _cdiv(Nk128, tk)
    tk = _round_up(_cdiv(Nk128, kt), 128)
    Nk_pad = kt * tk

    N_pad = _round_up(N, tm)
    mt = N_pad // tm

    # --- pad + cast streamed operands ---
    adj_bf = adj.astype(jnp.bfloat16)
    x_bf = x.astype(jnp.bfloat16)
    wA = prepared["wA"]
    if N_pad != N or Nk_pad != N:
        adj_bf = jnp.pad(adj_bf, ((0, N_pad - N), (0, Nk_pad - N)))
    if N_pad != N:
        x_bf = jnp.pad(x_bf, ((0, N_pad - N), (0, 0)))
    if Nk_pad != N:
        wA = jnp.pad(wA, ((0, Nk_pad - N), (0, 0)))

    # --- specs ---
    def full_spec(arr):
        shp = arr.shape
        return pl.BlockSpec(shp, lambda i, k, _n=len(shp): (0,) * _n)

    in_specs = [
        pl.BlockSpec((tm, tk), lambda i, k: (i, k)),   # adj: row x reduction tiles
        pl.BlockSpec((tm, C), lambda i, k: (i, 0)),    # x: per row tile
        pl.BlockSpec((tk, H), lambda i, k: (k, 0)),    # wA: streamed along reduction
    ] + [full_spec(p) for p in ordered]
    out_spec = pl.BlockSpec((tm, OUT_PAD), lambda i, k: (i, 0))

    vmem_limit = int(min(max(vmem_need(tm, tk) + (8 << 20), 32 << 20),
                         min(vmem_cap - (2 << 20), 100 << 20)))

    flops = 2 * N_pad * (Nk_pad * H + C * H + TWO_H * TWO_H + TWO_H * H
                         + H * H + H * OUT_PAD)
    transcendentals = N_pad * (OUT_PAD + 1)
    bytes_accessed = int(N_pad * Nk_pad * adj_isz + N_pad * C * 2
                         + mt * Nk_pad * H * 2 + params_bytes + N_pad * OUT_PAD * 4)

    out_padded = pl.pallas_call(
        dignn_kernel,
        out_shape=jax.ShapeDtypeStruct((N_pad, OUT_PAD), jnp.float32),
        grid_spec=pltpu.PrefetchScalarGridSpec(
            num_scalar_prefetch=0,
            grid=(mt, kt),                     # row tiles parallel, reduction last
            in_specs=in_specs,
            out_specs=out_spec,
            scratch_shapes=[pltpu.VMEM((tm, H), jnp.float32),      # xA accumulator
                            pltpu.VMEM((tm, TWO_H), jnp.bfloat16)],  # concat buffer
        ),
        compiler_params=pltpu.CompilerParams(
            dimension_semantics=("parallel", "arbitrary"),
            vmem_limit_bytes=vmem_limit,
        ),
        cost_estimate=pl.CostEstimate(
            flops=flops,
            transcendentals=transcendentals,
            bytes_accessed=bytes_accessed),
    )(adj_bf, x_bf, wA, *ordered)

    return out_padded[:N, :out_channels]


# ----------------------------------------------------------------------------- param prep
def prepare_params(raw, *, lane=_LANE):
    """Fold eval-mode BatchNorms and the 0.5 residual scale into the linears,
    cast matmul weights to bf16 and pad fc2 to a lane-dense (x128) output."""
    def bn_scale_shift(g, b, m, v):
        s = g * lax.rsqrt(v + EPS)
        return s, b - m * s

    bf16, f32 = jnp.bfloat16, jnp.float32
    p = {}
    # 0.5 residual scale folded into mlpA / mlpX (exact power-of-two scale);
    # compensated by scaling W.lins[0] by 2 so the W-MLP input is unchanged.
    p["wA"] = (0.5 * raw["wA"]).astype(bf16)
    p["bA"] = (0.5 * raw["bA"]).astype(f32)
    p["wX"] = (0.5 * raw["wX"]).astype(bf16)
    p["bX"] = (0.5 * raw["bX"]).astype(f32)
    p["w0"] = (2.0 * raw["w0"]).astype(bf16)
    p["b0"] = raw["b0"].astype(f32)

    # W.bns[0] (applied right before W.lins[1]) folded into w1/b1.
    s0, t0 = bn_scale_shift(raw["g0"], raw["be0"], raw["m0"], raw["v0"])   # (1, 2H)
    p["w1"] = (raw["w1"] * s0.reshape(-1, 1)).astype(bf16)
    p["b1"] = (raw["b1"] + t0 @ raw["w1"]).astype(f32)

    p["fc1w"] = raw["fc1w"].astype(bf16)
    p["fc1b"] = raw["fc1b"].astype(f32)

    # bn1 -> model(identity) -> bn2 composed, folded into fc2.
    s1, t1 = bn_scale_shift(raw["bn1g"], raw["bn1b"], raw["bn1m"], raw["bn1v"])
    s2, t2 = bn_scale_shift(raw["bn2g"], raw["bn2b"], raw["bn2m"], raw["bn2v"])
    s12 = s1 * s2
    t12 = t1 * s2 + t2
    fc2w = raw["fc2w"] * s12.reshape(-1, 1)
    fc2b = raw["fc2b"] + t12 @ raw["fc2w"]

    out_channels = raw["fc2w"].shape[1]
    out_pad = _round_up(max(out_channels, lane), lane)
    pad = out_pad - out_channels
    p["fc2w"] = jnp.pad(fc2w, ((0, 0), (0, pad))).astype(bf16)
    p["fc2b"] = jnp.pad(fc2b, ((0, 0), (0, pad)), constant_values=_NEG_INF).astype(f32)
    return p


# ----------------------------------------------------------------------------- references
def dignn_reference_f32(adj, x, p):
    """Full-precision, unfolded reference matching the PyTorch eval forward."""
    def bn(h, g, b, m, v):
        return (h - m) * (g * lax.rsqrt(v + EPS)) + b

    xA = adj @ p["wA"] + p["bA"]
    xX = x @ p["wX"] + p["bX"]
    h = jnp.concatenate([xA, xX], axis=-1) @ p["w0"] + p["b0"]
    h = jnp.maximum(h, 0.0)
    h = bn(h, p["g0"], p["be0"], p["m0"], p["v0"])
    h = h @ p["w1"] + p["b1"]
    h = jnp.maximum(h, 0.0)
    h = h + 0.5 * xA + 0.5 * xX
    h = jnp.maximum(h @ p["fc1w"] + p["fc1b"], 0.0)
    h = bn(h, p["bn1g"], p["bn1b"], p["bn1m"], p["bn1v"])
    # TODO(synk): ImplicitFunc_Neural_Simplified_L1 treated as identity.
    h = bn(h, p["bn2g"], p["bn2b"], p["bn2m"], p["bn2v"])
    logits = h @ p["fc2w"] + p["fc2b"]
    return jax.nn.log_softmax(logits, axis=1)


def dignn_reference_folded(adj, x, pp, out_channels):
    """bf16/folded reference using the exact same math as the kernel."""
    bf16, f32 = jnp.bfloat16, jnp.float32
    dot = functools.partial(jnp.dot, preferred_element_type=f32)
    xA = dot(adj.astype(bf16), pp["wA"]) + pp["bA"]
    xX = dot(x.astype(bf16), pp["wX"]) + pp["bX"]
    hcat = jnp.concatenate([xA.astype(bf16), xX.astype(bf16)], axis=-1)
    h = dot(hcat, pp["w0"]) + pp["b0"]
    h = jnp.maximum(h, 0.0)
    h = dot(h.astype(bf16), pp["w1"]) + pp["b1"]
    h = jnp.maximum(h, 0.0)
    h = h + xA + xX
    h = jnp.maximum(dot(h.astype(bf16), pp["fc1w"]) + pp["fc1b"], 0.0)
    logits = dot(h.astype(bf16), pp["fc2w"]) + pp["fc2b"]
    return jax.nn.log_softmax(logits, axis=1)[:, :out_channels]


# ----------------------------------------------------------------------------- init
def init_params(key, num_nodes, in_channels, hidden, out_channels):
    ks = iter(jax.random.split(key, 40))

    def lin(in_f, out_f):
        w = 0.1 * jax.random.normal(next(ks), (in_f, out_f), jnp.float32)
        b = 0.1 * jax.random.normal(next(ks), (1, out_f), jnp.float32)
        return w, b

    def bn(f):
        g = 1.0 + 0.1 * jax.random.normal(next(ks), (1, f), jnp.float32)
        b = 0.1 * jax.random.normal(next(ks), (1, f), jnp.float32)
        m = 0.1 * jax.random.normal(next(ks), (1, f), jnp.float32)
        v = jax.random.uniform(next(ks), (1, f), jnp.float32, 0.5, 1.5)
        return g, b, m, v

    p = {}
    p["wA"], p["bA"] = lin(num_nodes, hidden)               # mlpA (1-layer MLP)
    p["wX"], p["bX"] = lin(in_channels, hidden)              # mlpX (1-layer MLP)
    p["w0"], p["b0"] = lin(2 * hidden, 2 * hidden)           # W.lins[0]
    p["g0"], p["be0"], p["m0"], p["v0"] = bn(2 * hidden)     # W.bns[0]
    p["w1"], p["b1"] = lin(2 * hidden, hidden)               # W.lins[1]
    p["fc1w"], p["fc1b"] = lin(hidden, hidden)
    p["bn1g"], p["bn1b"], p["bn1m"], p["bn1v"] = bn(hidden)
    p["bn2g"], p["bn2b"], p["bn2m"], p["bn2v"] = bn(hidden)
    p["fc2w"], p["fc2b"] = lin(hidden, out_channels)
    return p


if __name__ == "__main__":
    key = jax.random.PRNGKey(0)
    k_x, k_row, k_col, k_p = jax.random.split(key, 4)

    num_nodes = 256
    in_channels = 16
    hidden = 32
    out_channels = 8
    num_edges = 1024

    x = jax.random.normal(k_x, (num_nodes, in_channels), jnp.float32)

    # edge_index -> dense adjacency (as the sparse COO adj in the module)
    row = jax.random.randint(k_row, (num_edges,), 0, num_nodes)
    col = jax.random.randint(k_col, (num_edges,), 0, num_nodes)
    adj = jnp.zeros((num_nodes, num_nodes), jnp.float32).at[row, col].set(1.0)

    raw = init_params(k_p, num_nodes, in_channels, hidden, out_channels)
    prepared = prepare_params(raw)

    # tm=128, tk=128 -> grid (2, 2): exercises the v7x 2-TC 'parallel' row axis
    # and the k-accumulation/epilogue gating; negligible overhead at this size.
    out = dignn_forward(adj, x, prepared, out_channels, tm=128, tk=128)
    out = jax.block_until_ready(out)

    ref_folded = dignn_reference_folded(adj, x, prepared, out_channels)
    ref_f32 = dignn_reference_f32(adj, x, raw)

    assert out.shape == (num_nodes, out_channels)
    assert jnp.allclose(out, ref_folded, atol=2e-3, rtol=2e-3), \
        "mismatch vs bf16/folded reference"
    assert jnp.allclose(out, ref_f32, atol=1e-1, rtol=1e-1), \
        "mismatch vs full-f32 unfolded reference"

    print("KERNEL_OK")
</pallas_src>

<mosaic_0001>
module attributes {stable_mosaic.version = 11 : i64} {
  func.func @dignn_kernel(%arg0: i32, %arg1: i32, %arg2: memref<128x128xbf16, #tpu.memory_space<vmem>>, %arg3: memref<128x16xbf16, #tpu.memory_space<vmem>>, %arg4: memref<128x32xbf16, #tpu.memory_space<vmem>>, %arg5: memref<1x32xf32, #tpu.memory_space<vmem>>, %arg6: memref<16x32xbf16, #tpu.memory_space<vmem>>, %arg7: memref<1x32xf32, #tpu.memory_space<vmem>>, %arg8: memref<64x64xbf16, #tpu.memory_space<vmem>>, %arg9: memref<1x64xf32, #tpu.memory_space<vmem>>, %arg10: memref<64x32xbf16, #tpu.memory_space<vmem>>, %arg11: memref<1x32xf32, #tpu.memory_space<vmem>>, %arg12: memref<32x32xbf16, #tpu.memory_space<vmem>>, %arg13: memref<1x32xf32, #tpu.memory_space<vmem>>, %arg14: memref<32x128xbf16, #tpu.memory_space<vmem>>, %arg15: memref<1x128xf32, #tpu.memory_space<vmem>>, %arg16: memref<128x128xf32, #tpu.memory_space<vmem>>, %arg17: memref<128x32xf32, #tpu.memory_space<vmem>>, %arg18: memref<128x64xbf16, #tpu.memory_space<vmem>>) attributes {dimension_semantics = [#tpu.dimension_semantics<parallel>, #tpu.dimension_semantics<arbitrary>], iteration_bounds = array<i64: 2, 2>, scalar_prefetch = 0 : i64, scratch_operands = 2 : i64, tpu.core_type = #tpu.core_type<tc>, window_params = [{transform_indices = @transform_0, window_bounds = array<i64: 128, 128>}, {transform_indices = @transform_1, window_bounds = array<i64: 128, 16>}, {transform_indices = @transform_2, window_bounds = array<i64: 128, 32>}, {pipeline_mode = #tpu.pipeline_mode<synchronous>, transform_indices = @transform_3, window_bounds = array<i64: 1, 32>}, {pipeline_mode = #tpu.pipeline_mode<synchronous>, transform_indices = @transform_4, window_bounds = array<i64: 16, 32>}, {pipeline_mode = #tpu.pipeline_mode<synchronous>, transform_indices = @transform_5, window_bounds = array<i64: 1, 32>}, {pipeline_mode = #tpu.pipeline_mode<synchronous>, transform_indices = @transform_6, window_bounds = array<i64: 64, 64>}, {pipeline_mode = #tpu.pipeline_mode<synchronous>, transform_indices = @transform_7, window_bounds = array<i64: 1, 64>}, {pipeline_mode = #tpu.pipeline_mode<synchronous>, transform_indices = @transform_8, window_bounds = array<i64: 64, 32>}, {pipeline_mode = #tpu.pipeline_mode<synchronous>, transform_indices = @transform_9, window_bounds = array<i64: 1, 32>}, {pipeline_mode = #tpu.pipeline_mode<synchronous>, transform_indices = @transform_10, window_bounds = array<i64: 32, 32>}, {pipeline_mode = #tpu.pipeline_mode<synchronous>, transform_indices = @transform_11, window_bounds = array<i64: 1, 32>}, {pipeline_mode = #tpu.pipeline_mode<synchronous>, transform_indices = @transform_12, window_bounds = array<i64: 32, 128>}, {pipeline_mode = #tpu.pipeline_mode<synchronous>, transform_indices = @transform_13, window_bounds = array<i64: 1, 128>}, {transform_indices = @transform_14, window_bounds = array<i64: 128, 128>}]} {
    %c0_i32 = arith.constant 0 : i32
    %0 = arith.cmpi eq, %arg1, %c0_i32 : i32
    %1 = arith.extui %0 : i1 to i32
    %c0_i32_0 = arith.constant 0 : i32
    %2 = arith.cmpi ne, %1, %c0_i32_0 : i32
    scf.if %2 {
      %cst_9 = arith.constant 0.000000e+00 : f32
      %12 = vector.broadcast %cst_9 : f32 to vector<128x32xf32>
      %c0_10 = arith.constant 0 : index
      %c0_11 = arith.constant 0 : index
      %13 = vector.load %arg17[%c0_10, %c0_11] : memref<128x32xf32, #tpu.memory_space<vmem>>, vector<128x32xf32>
      tpu.vector_store %arg17[%c0_10, %c0_11], %12 {strides = array<i32>} : memref<128x32xf32, #tpu.memory_space<vmem>>, vector<128x32xf32>,
    } else {
    }
    %c0 = arith.constant 0 : index
    %c0_1 = arith.constant 0 : index
    %3 = vector.load %arg17[%c0, %c0_1] : memref<128x32xf32, #tpu.memory_space<vmem>>, vector<128x32xf32>
    %c0_2 = arith.constant 0 : index
    %c0_3 = arith.constant 0 : index
    %4 = vector.load %arg2[%c0_2, %c0_3] : memref<128x128xbf16, #tpu.memory_space<vmem>>, vector<128x128xbf16>
    %c0_4 = arith.constant 0 : index
    %c0_5 = arith.constant 0 : index
    %5 = vector.load %arg4[%c0_4, %c0_5] : memref<128x32xbf16, #tpu.memory_space<vmem>>, vector<128x32xbf16>
    %cst = arith.constant dense<0.000000e+00> : vector<128x32xf32>
    %6 = tpu.matmul %4, %5, %cst {dimension_numbers = #tpu.dot_dimension_numbers<[1], [0], [0], [1], [0, 0, 1, 1], [], []>} : vector<128x128xbf16>, vector<128x32xbf16>, vector<128x32xf32> -> vector<128x32xf32>
    %7 = arith.addf %3, %6 : vector<128x32xf32>
    %c0_6 = arith.constant 0 : index
    %c0_7 = arith.constant 0 : index
    %8 = vector.load %arg17[%c0_6, %c0_7] : memref<128x32xf32, #tpu.memory_space<vmem>>, vector<128x32xf32>
    tpu.vector_store %arg17[%c0_6, %c0_7], %7 {strides = array<i32>} : memref<128x32xf32, #tpu.memory_space<vmem>>, vector<128x32xf32>,
    %c1_i32 = arith.constant 1 : i32
    %9 = arith.cmpi eq, %arg1, %c1_i32 : i32
    %10 = arith.extui %9 : i1 to i32
    %c0_i32_8 = arith.constant 0 : i32
    %11 = arith.cmpi ne, %10, %c0_i32_8 : i32
    scf.if %11 {
      %c0_9 = arith.constant 0 : index
      %c0_10 = arith.constant 0 : index
      %12 = vector.load %arg17[%c0_9, %c0_10] : memref<128x32xf32, #tpu.memory_space<vmem>>, vector<128x32xf32>
      %c0_11 = arith.constant 0 : index
      %c0_12 = arith.constant 0 : index
      %13 = vector.load %arg5[%c0_11, %c0_12] : memref<1x32xf32, #tpu.memory_space<vmem>>, vector<1x32xf32>
      %14 = vector.broadcast %13 : vector<1x32xf32> to vector<128x32xf32>
      %15 = arith.addf %12, %14 : vector<128x32xf32>
      %c0_13 = arith.constant 0 : index
      %c0_14 = arith.constant 0 : index
      %16 = vector.load %arg3[%c0_13, %c0_14] : memref<128x16xbf16, #tpu.memory_space<vmem>>, vector<128x16xbf16>
      %c0_15 = arith.constant 0 : index
      %c0_16 = arith.constant 0 : index
      %17 = vector.load %arg6[%c0_15, %c0_16] : memref<16x32xbf16, #tpu.memory_space<vmem>>, vector<16x32xbf16>
      %cst_17 = arith.constant dense<0.000000e+00> : vector<128x32xf32>
      %18 = tpu.matmul %16, %17, %cst_17 {dimension_numbers = #tpu.dot_dimension_numbers<[1], [0], [0], [1], [0, 0, 1, 1], [], []>} : vector<128x16xbf16>, vector<16x32xbf16>, vector<128x32xf32> -> vector<128x32xf32>
      %c0_18 = arith.constant 0 : index
      %c0_19 = arith.constant 0 : index
      %19 = vector.load %arg7[%c0_18, %c0_19] : memref<1x32xf32, #tpu.memory_space<vmem>>, vector<1x32xf32>
      %20 = vector.broadcast %19 : vector<1x32xf32> to vector<128x32xf32>
      %21 = arith.addf %18, %20 : vector<128x32xf32>
      %22 = arith.truncf %15 : vector<128x32xf32> to vector<128x32xbf16>
      %c0_20 = arith.constant 0 : index
      %c0_21 = arith.constant 0 : index
      %23 = vector.load %arg18[%c0_20, %c0_21] : memref<128x64xbf16, #tpu.memory_space<vmem>>, vector<128x32xbf16>
      tpu.vector_store %arg18[%c0_20, %c0_21], %22 {strides = array<i32>} : memref<128x64xbf16, #tpu.memory_space<vmem>>, vector<128x32xbf16>,
      %24 = arith.truncf %21 : vector<128x32xf32> to vector<128x32xbf16>
      %c0_22 = arith.constant 0 : index
      %c32 = arith.constant 32 : index
      %25 = vector.load %arg18[%c0_22, %c32] : memref<128x64xbf16, #tpu.memory_space<vmem>>, vector<128x32xbf16>
      tpu.vector_store %arg18[%c0_22, %c32], %24 {strides = array<i32>} : memref<128x64xbf16, #tpu.memory_space<vmem>>, vector<128x32xbf16>,
      %c0_23 = arith.constant 0 : index
      %c0_24 = arith.constant 0 : index
      %26 = vector.load %arg18[%c0_23, %c0_24] : memref<128x64xbf16, #tpu.memory_space<vmem>>, vector<128x64xbf16>
      %c0_25 = arith.constant 0 : index
      %c0_26 = arith.constant 0 : index
      %27 = vector.load %arg8[%c0_25, %c0_26] : memref<64x64xbf16, #tpu.memory_space<vmem>>, vector<64x64xbf16>
      %cst_27 = arith.constant dense<0.000000e+00> : vector<128x64xf32>
      %28 = tpu.matmul %26, %27, %cst_27 {dimension_numbers = #tpu.dot_dimension_numbers<[1], [0], [0], [1], [0, 0, 1, 1], [], []>} : vector<128x64xbf16>, vector<64x64xbf16>, vector<128x64xf32> -> vector<128x64xf32>
      %c0_28 = arith.constant 0 : index
      %c0_29 = arith.constant 0 : index
      %29 = vector.load %arg9[%c0_28, %c0_29] : memref<1x64xf32, #tpu.memory_space<vmem>>, vector<1x64xf32>
      %30 = vector.broadcast %29 : vector<1x64xf32> to vector<128x64xf32>
      %31 = arith.addf %28, %30 : vector<128x64xf32>
      %cst_30 = arith.constant 0.000000e+00 : f32
      %32 = vector.broadcast %cst_30 : f32 to vector<128x64xf32>
      %33 = arith.maximumf %31, %32 : vector<128x64xf32>
      %34 = arith.truncf %33 : vector<128x64xf32> to vector<128x64xbf16>
      %c0_31 = arith.constant 0 : index
      %c0_32 = arith.constant 0 : index
      %35 = vector.load %arg10[%c0_31, %c0_32] : memref<64x32xbf16, #tpu.memory_space<vmem>>, vector<64x32xbf16>
      %cst_33 = arith.constant dense<0.000000e+00> : vector<128x32xf32>
      %36 = tpu.matmul %34, %35, %cst_33 {dimension_numbers = #tpu.dot_dimension_numbers<[1], [0], [0], [1], [0, 0, 1, 1], [], []>} : vector<128x64xbf16>, vector<64x32xbf16>, vector<128x32xf32> -> vector<128x32xf32>
      %c0_34 = arith.constant 0 : index
      %c0_35 = arith.constant 0 : index
      %37 = vector.load %arg11[%c0_34, %c0_35] : memref<1x32xf32, #tpu.memory_space<vmem>>, vector<1x32xf32>
      %38 = vector.broadcast %37 : vector<1x32xf32> to vector<128x32xf32>
      %39 = arith.addf %36, %38 : vector<128x32xf32>
      %cst_36 = arith.constant 0.000000e+00 : f32
      %40 = vector.broadcast %cst_36 : f32 to vector<128x32xf32>
      %41 = arith.maximumf %39, %40 : vector<128x32xf32>
      %42 = arith.addf %41, %15 : vector<128x32xf32>
      %43 = arith.addf %42, %21 : vector<128x32xf32>
      %44 = arith.truncf %43 : vector<128x32xf32> to vector<128x32xbf16>
      %c0_37 = arith.constant 0 : index
      %c0_38 = arith.constant 0 : index
      %45 = vector.load %arg12[%c0_37, %c0_38] : memref<32x32xbf16, #tpu.memory_space<vmem>>, vector<32x32xbf16>
      %cst_39 = arith.constant dense<0.000000e+00> : vector<128x32xf32>
      %46 = tpu.matmul %44, %45, %cst_39 {dimension_numbers = #tpu.dot_dimension_numbers<[1], [0], [0], [1], [0, 0, 1, 1], [], []>} : vector<128x32xbf16>, vector<32x32xbf16>, vector<128x32xf32> -> vector<128x32xf32>
      %c0_40 = arith.constant 0 : index
      %c0_41 = arith.constant 0 : index
      %47 = vector.load %arg13[%c0_40, %c0_41] : memref<1x32xf32, #tpu.memory_space<vmem>>, vector<1x32xf32>
      %48 = vector.broadcast %47 : vector<1x32xf32> to vector<128x32xf32>
      %49 = arith.addf %46, %48 : vector<128x32xf32>
      %cst_42 = arith.constant 0.000000e+00 : f32
      %50 = vector.broadcast %cst_42 : f32 to vector<128x32xf32>
      %51 = arith.maximumf %49, %50 : vector<128x32xf32>
      %52 = arith.truncf %51 : vector<128x32xf32> to vector<128x32xbf16>
      %c0_43 = arith.constant 0 : index
      %c0_44 = arith.constant 0 : index
      %53 = vector.load %arg14[%c0_43, %c0_44] : memref<32x128xbf16, #tpu.memory_space<vmem>>, vector<32x128xbf16>
      %cst_45 = arith.constant dense<0.000000e+00> : vector<128x128xf32>
      %54 = tpu.matmul %52, %53, %cst_45 {dimension_numbers = #tpu.dot_dimension_numbers<[1], [0], [0], [1], [0, 0, 1, 1], [], []>} : vector<128x32xbf16>, vector<32x128xbf16>, vector<128x128xf32> -> vector<128x128xf32>
      %c0_46 = arith.constant 0 : index
      %c0_47 = arith.constant 0 : index
      %55 = vector.load %arg15[%c0_46, %c0_47] : memref<1x128xf32, #tpu.memory_space<vmem>>, vector<1x128xf32>
      %56 = vector.broadcast %55 : vector<1x128xf32> to vector<128x128xf32>
      %57 = arith.addf %54, %56 : vector<128x128xf32>
      %cst_48 = arith.constant dense<0xFF800000> : vector<128xf32>
      %58 = vector.multi_reduction <maximumf>, %57, %cst_48 [1] : vector<128x128xf32> to vector<128xf32>
      %59 = vector.shape_cast %58 : vector<128xf32> to vector<128x1xf32>
      %60 = vector.broadcast %59 : vector<128x1xf32> to vector<128x128xf32>
      %61 = arith.subf %57, %60 : vector<128x128xf32>
      %62 = math.exp %61 : vector<128x128xf32>
      %cst_49 = arith.constant dense<0.000000e+00> : vector<128xf32>
      %63 = vector.multi_reduction <add>, %62, %cst_49 [1] : vector<128x128xf32> to vector<128xf32>
      %64 = vector.shape_cast %63 : vector<128xf32> to vector<128x1xf32>
      %65 = math.log %64 : vector<128x1xf32>
      %66 = vector.broadcast %65 : vector<128x1xf32> to vector<128x128xf32>
      %67 = arith.subf %61, %66 : vector<128x128xf32>
      %c0_50 = arith.constant 0 : index
      %c0_51 = arith.constant 0 : index
      %68 = vector.load %arg16[%c0_50, %c0_51] : memref<128x128xf32, #tpu.memory_space<vmem>>, vector<128x128xf32>
      tpu.vector_store %arg16[%c0_50, %c0_51], %67 {strides = array<i32>} : memref<128x128xf32, #tpu.memory_space<vmem>>, vector<128x128xf32>,
    } else {
    }
    return
  }
  func.func @transform_0(%arg0: i32, %arg1: i32) -> (i32, i32) {
    %c0_i32 = arith.constant 0 : i32
    return %arg0, %arg1 : i32, i32
  }
  func.func @transform_1(%arg0: i32, %arg1: i32) -> (i32, i32) {
    %c0_i32 = arith.constant 0 : i32
    %c0_i32_0 = arith.constant 0 : i32
    return %arg0, %c0_i32 : i32, i32
  }
  func.func @transform_2(%arg0: i32, %arg1: i32) -> (i32, i32) {
    %c0_i32 = arith.constant 0 : i32
    %c0_i32_0 = arith.constant 0 : i32
    return %arg1, %c0_i32 : i32, i32
  }
  func.func @transform_3(%arg0: i32, %arg1: i32) -> (i32, i32) {
    %c0_i32 = arith.constant 0 : i32
    %c0_i32_0 = arith.constant 0 : i32
    %c0_i32_1 = arith.constant 0 : i32
    return %c0_i32, %c0_i32_0 : i32, i32
  }
  func.func @transform_4(%arg0: i32, %arg1: i32) -> (i32, i32) {
    %c0_i32 = arith.constant 0 : i32
    %c0_i32_0 = arith.constant 0 : i32
    %c0_i32_1 = arith.constant 0 : i32
    return %c0_i32, %c0_i32_0 : i32, i32
  }
  func.func @transform_5(%arg0: i32, %arg1: i32) -> (i32, i32) {
    %c0_i32 = arith.constant 0 : i32
    %c0_i32_0 = arith.constant 0 : i32
    %c0_i32_1 = arith.constant 0 : i32
    return %c0_i32, %c0_i32_0 : i32, i32
  }
  func.func @transform_6(%arg0: i32, %arg1: i32) -> (i32, i32) {
    %c0_i32 = arith.constant 0 : i32
    %c0_i32_0 = arith.constant 0 : i32
    %c0_i32_1 = arith.constant 0 : i32
    return %c0_i32, %c0_i32_0 : i32, i32
  }
  func.func @transform_7(%arg0: i32, %arg1: i32) -> (i32, i32) {
    %c0_i32 = arith.constant 0 : i32
    %c0_i32_0 = arith.constant 0 : i32
    %c0_i32_1 = arith.constant 0 : i32
    return %c0_i32, %c0_i32_0 : i32, i32
  }
  func.func @transform_8(%arg0: i32, %arg1: i32) -> (i32, i32) {
    %c0_i32 = arith.constant 0 : i32
    %c0_i32_0 = arith.constant 0 : i32
    %c0_i32_1 = arith.constant 0 : i32
    return %c0_i32, %c0_i32_0 : i32, i32
  }
  func.func @transform_9(%arg0: i32, %arg1: i32) -> (i32, i32) {
    %c0_i32 = arith.constant 0 : i32
    %c0_i32_0 = arith.constant 0 : i32
    %c0_i32_1 = arith.constant 0 : i32
    return %c0_i32, %c0_i32_0 : i32, i32
  }
  func.func @transform_10(%arg0: i32, %arg1: i32) -> (i32, i32) {
    %c0_i32 = arith.constant 0 : i32
    %c0_i32_0 = arith.constant 0 : i32
    %c0_i32_1 = arith.constant 0 : i32
    return %c0_i32, %c0_i32_0 : i32, i32
  }
  func.func @transform_11(%arg0: i32, %arg1: i32) -> (i32, i32) {
    %c0_i32 = arith.constant 0 : i32
    %c0_i32_0 = arith.constant 0 : i32
    %c0_i32_1 = arith.constant 0 : i32
    return %c0_i32, %c0_i32_0 : i32, i32
  }
  func.func @transform_12(%arg0: i32, %arg1: i32) -> (i32, i32) {
    %c0_i32 = arith.constant 0 : i32
    %c0_i32_0 = arith.constant 0 : i32
    %c0_i32_1 = arith.constant 0 : i32
    return %c0_i32, %c0_i32_0 : i32, i32
  }
  func.func @transform_13(%arg0: i32, %arg1: i32) -> (i32, i32) {
    %c0_i32 = arith.constant 0 : i32
    %c0_i32_0 = arith.constant 0 : i32
    %c0_i32_1 = arith.constant 0 : i32
    return %c0_i32, %c0_i32_0 : i32, i32
  }
  func.func @transform_14(%arg0: i32, %arg1: i32) -> (i32, i32) {
    %c0_i32 = arith.constant 0 : i32
    %c0_i32_0 = arith.constant 0 : i32
    return %arg0, %c0_i32 : i32, i32
  }
}

</mosaic_0001>

<llo_original>
// kernel: tpu_custom_call.1
$region0: #{tpu_custom_call.1}
  #allocation0 [shape = 'u32[]', space=smem, size = 0x4, offset = 0x4, fixed_abs, tag = 'smem constant byte address 0x4 - core index']
  #allocation1 [shape = 'u32[72,128]{1,0:T(1,128)}', space=vmem, size = 0x9000, scoped, tag = 'internal scratch']
  #allocation2 [shape = 'f32[128,32]{1,0:T(8,128)}', space=vmem, size = 0x10000, scoped, tag = 'scratch operand']
  #allocation3 [shape = 'bf16[128,64]{1,0:T(8,128)(2,1)}', space=vmem, size = 0x8000, scoped, tag = 'scratch operand']
  %s0 = inlined_call_operand.vmem [shape: bf16[256,256], index: 0, kind: input, shape index: {}]
  %s1 = inlined_call_operand.vmem [shape: bf16[256,16], index: 1, kind: input, shape index: {}]
  %s2 = inlined_call_operand.vmem [shape: bf16[256,32], index: 2, kind: input, shape index: {}]
  %s3 = inlined_call_operand.vmem [shape: f32[1,32], index: 3, kind: input, shape index: {}]
  %s4 = inlined_call_operand.vmem [shape: bf16[16,32], index: 4, kind: input, shape index: {}]
  %s5 = inlined_call_operand.vmem [shape: f32[1,32], index: 5, kind: input, shape index: {}]
  %s6 = inlined_call_operand.vmem [shape: bf16[64,64], index: 6, kind: input, shape index: {}]
  %s7 = inlined_call_operand.vmem [shape: f32[1,64], index: 7, kind: input, shape index: {}]
  %s8 = inlined_call_operand.vmem [shape: bf16[64,32], index: 8, kind: input, shape index: {}]
  %s9 = inlined_call_operand.vmem [shape: f32[1,32], index: 9, kind: input, shape index: {}]
  %s10 = inlined_call_operand.vmem [shape: bf16[32,32], index: 10, kind: input, shape index: {}]
  %s11 = inlined_call_operand.vmem [shape: f32[1,32], index: 11, kind: input, shape index: {}]
  %s12 = inlined_call_operand.vmem [shape: bf16[32,128], index: 12, kind: input, shape index: {}]
  %s13 = inlined_call_operand.vmem [shape: f32[1,128], index: 13, kind: input, shape index: {}]
  %s14 = inlined_call_operand.hbm [shape: f32[256,128], index: 14, kind: output, shape index: {}]
  %s15 = sld [smem:[#allocation0]]
  $region138: #{tpu_custom_call.1} parent=0
    _
  %s17 = ssub.s32 1, %s15
  %s18 = scalar_select 0, %s17, %s15
  $region1: #{tpu_custom_call.1} parent=0
    #allocation4 [shape = 'u8[65536]{0}', space=vmem, size = 0x10000, scoped, tag = 'input window, operand 0']
    #allocation5 [shape = 'u8[131072]{0}', space=vmem, size = 0x20000, scoped, tag = 'output window, operand 0']
    #allocation6 [shape = 's32[2]{0}', space=sflag, size = 0x8, scoped, tag = 'scoped memory for tpu_custom_call.1']
    %19 = vsyncpa [#allocation6], 0
    %s20 = scalar_lea.sflag [#allocation6], 1
    %21 = vsyncpa %s20, 0
    loop: start=0, step=1, limit=6
    $region2: #{tpu_custom_call.1} parent=1 // loop_pre_header
      _
    $region3: #{tpu_custom_call.1} parent=1 // loop_header
      %s23 = sphi 0, %s27
      %p24 = scmp.ge.s32.totalorder %s23, 6
      %s30 = sphi 0, %s42
      %s31 = sphi 0, %s38
      %s32 = sphi 0, %s30
      %s33 = sphi 0, %s31
      %s34 = sphi 0, %s32
      %s35 = sphi 0, %s33
      %s47 = sphi 0, %s49
      %s50 = sphi 0, %s47
      %s51 = sphi 0, %s50
      %s67 = sphi 0, %s51
      %s73 = sphi 0, %s75
      %s76 = sphi 0, %s73
      %s77 = sphi 0, %s76
      %s93 = sphi 0, %s77
      %s99 = sphi 0, %s101
      %s102 = sphi 0, %s99
      %s103 = sphi 0, %s102
      %s119 = sphi 0, %s103
      %s123 = sphi 0, %s123
      %s125 = sphi 0, %s123
      %s126 = sphi 0, %s125
      %s140 = sphi 0, %s126
      %s144 = sphi 0, %s144
      %s146 = sphi 0, %s144
      %s147 = sphi 0, %s146
      %s161 = sphi 0, %s147
      %s165 = sphi 0, %s165
      %s167 = sphi 0, %s165
      %s168 = sphi 0, %s167
      %s182 = sphi 0, %s168
      %s186 = sphi 0, %s186
      %s188 = sphi 0, %s186
      %s189 = sphi 0, %s188
      %s203 = sphi 0, %s189
      %s207 = sphi 0, %s207
      %s209 = sphi 0, %s207
      %s210 = sphi 0, %s209
      %s224 = sphi 0, %s210
      %s228 = sphi 0, %s228
      %s230 = sphi 0, %s228
      %s231 = sphi 0, %s230
      %s245 = sphi 0, %s231
      %s249 = sphi 0, %s249
      %s251 = sphi 0, %s249
      %s252 = sphi 0, %s251
      %s266 = sphi 0, %s252
      %s270 = sphi 0, %s270
      %s272 = sphi 0, %s270
      %s273 = sphi 0, %s272
      %s287 = sphi 0, %s273
      %s291 = sphi 0, %s291
      %s293 = sphi 0, %s291
      %s294 = sphi 0, %s293
      %s308 = sphi 0, %s294
      %s312 = sphi 0, %s312
      %s314 = sphi 0, %s312
      %s315 = sphi 0, %s314
      %s329 = sphi 0, %s315
      %s333 = sphi 0, %s333
      %s335 = sphi 0, %s333
      %s336 = sphi 0, %s335
      %s350 = sphi 0, %s336
      %s356 = sphi 0, %s358
      %s359 = sphi 0, %s356
      %s360 = sphi 0, %s359
      %s376 = sphi 0, %s360
    $region4: #{tpu_custom_call.1} parent=1 // loop_header_branch
      %26 = sbr.rel (%p24) target = $region8
    $region5: #{tpu_custom_call.1} parent=1 // loop_body
      %s28 = ssub.s32 %s23, 1
      %s29 = ssub.s32 %s23, 2
      %s36 = sadd.s32 1, %s31
      %p37 = scmp.ge.s32.totalorder %s36, 2
      %s38 = scalar_select %p37, 0, %s36
      %s39 = sadd.s32 1, %s30
      %s40 = scalar_select %p37, %s39, %s30
      %p41 = scmp.ge.s32.totalorder %s40, 2
      %s42 = scalar_select %p41, 0, %s40
      %s43 = ssub.s32 %s30, %s42
      %s44 = ssub.s32 %s31, %s38
      %s45 = sor.u32 %s43, %s44
      %p46 = scmp.eq.s32.totalorder %s45, 0
      %s48 = sadd.s32 %s47, 1
      %s49 = scalar_select %p46, %s47, %s48
      %p52 = pneg %p46
      %p53 = scmp.eq.s32.totalorder %s23, 3
      %p54 = por %p52, %p53
      %p55 = scmp.ne.s32.totalorder %s47, %s50
      %p56 = scmp.eq.s32.totalorder %s23, 0
      %p57 = por %p55, %p56
      %p58 = scmp.ne.s32.totalorder %s47, %s50
      %p59 = scmp.eq.s32.totalorder %s28, 3
      %p60 = por %p58, %p59
      %p61 = scmp.ne.s32.totalorder %s50, %s51
      %p62 = scmp.eq.s32.totalorder %s28, 0
      %p63 = por %p61, %p62
      %p64 = scmp.ne.s32.totalorder %s50, %s51
      %p65 = scmp.eq.s32.totalorder %s29, 3
      %p66 = por %p64, %p65
      %p68 = scmp.ne.s32.totalorder %s51, %s67
      %p69 = scmp.eq.s32.totalorder %s29, 0
      %p70 = por %p68, %p69
      %s71 = ssub.s32 %s30, %s42
      %p72 = scmp.eq.s32.totalorder %s71, 0
      %s74 = sadd.s32 %s73, 1
      %s75 = scalar_select %p72, %s73, %s74
      %p78 = pneg %p72
      %p79 = scmp.eq.s32.totalorder %s23, 3
      %p80 = por %p78, %p79
      %p81 = scmp.ne.s32.totalorder %s73, %s76
      %p82 = scmp.eq.s32.totalorder %s23, 0
      %p83 = por %p81, %p82
      %p84 = scmp.ne.s32.totalorder %s73, %s76
      %p85 = scmp.eq.s32.totalorder %s28, 3
      %p86 = por %p84, %p85
      %p87 = scmp.ne.s32.totalorder %s76, %s77
      %p88 = scmp.eq.s32.totalorder %s28, 0
      %p89 = por %p87, %p88
      %p90 = scmp.ne.s32.totalorder %s76, %s77
      %p91 = scmp.eq.s32.totalorder %s29, 3
      %p92 = por %p90, %p91
      %p94 = scmp.ne.s32.totalorder %s77, %s93
      %p95 = scmp.eq.s32.totalorder %s29, 0
      %p96 = por %p94, %p95
      %s97 = ssub.s32 %s31, %s38
      %p98 = scmp.eq.s32.totalorder %s97, 0
      %s100 = sadd.s32 %s99, 1
      %s101 = scalar_select %p98, %s99, %s100
      %p104 = pneg %p98
      %p105 = scmp.eq.s32.totalorder %s23, 3
      %p106 = por %p104, %p105
      %p107 = scmp.ne.s32.totalorder %s99, %s102
      %p108 = scmp.eq.s32.totalorder %s23, 0
      %p109 = por %p107, %p108
      %p110 = scmp.ne.s32.totalorder %s99, %s102
      %p111 = scmp.eq.s32.totalorder %s28, 3
      %p112 = por %p110, %p111
      %p113 = scmp.ne.s32.totalorder %s102, %s103
      %p114 = scmp.eq.s32.totalorder %s28, 0
      %p115 = por %p113, %p114
      %p116 = scmp.ne.s32.totalorder %s102, %s103
      %p117 = scmp.eq.s32.totalorder %s29, 3
      %p118 = por %p116, %p117
      %p120 = scmp.ne.s32.totalorder %s103, %s119
      %p121 = scmp.eq.s32.totalorder %s29, 0
      %p122 = por %p120, %p121
      %s124 = sadd.s32 %s123, 1
      %p127 = scmp.eq.s32.totalorder %s23, 3
      %p128 = scmp.ne.s32.totalorder %s123, %s125
      %p129 = scmp.eq.s32.totalorder %s23, 0
      %p130 = por %p128, %p129
      %p131 = scmp.ne.s32.totalorder %s123, %s125
      %p132 = scmp.eq.s32.totalorder %s28, 3
      %p133 = por %p131, %p132
      %p134 = scmp.ne.s32.totalorder %s125, %s126
      %p135 = scmp.eq.s32.totalorder %s28, 0
      %p136 = por %p134, %p135
      %p137 = scmp.ne.s32.totalorder %s125, %s126
      %p138 = scmp.eq.s32.totalorder %s29, 3
      %p139 = por %p137, %p138
      %p141 = scmp.ne.s32.totalorder %s126, %s140
      %p142 = scmp.eq.s32.totalorder %s29, 0
      %p143 = por %p141, %p142
      %s145 = sadd.s32 %s144, 1
      %p148 = scmp.eq.s32.totalorder %s23, 3
      %p149 = scmp.ne.s32.totalorder %s144, %s146
      %p150 = scmp.eq.s32.totalorder %s23, 0
      %p151 = por %p149, %p150
      %p152 = scmp.ne.s32.totalorder %s144, %s146
      %p153 = scmp.eq.s32.totalorder %s28, 3
      %p154 = por %p152, %p153
      %p155 = scmp.ne.s32.totalorder %s146, %s147
      %p156 = scmp.eq.s32.totalorder %s28, 0
      %p157 = por %p155, %p156
      %p158 = scmp.ne.s32.totalorder %s146, %s147
      %p159 = scmp.eq.s32.totalorder %s29, 3
      %p160 = por %p158, %p159
      %p162 = scmp.ne.s32.totalorder %s147, %s161
      %p163 = scmp.eq.s32.totalorder %s29, 0
      %p164 = por %p162, %p163
      %s166 = sadd.s32 %s165, 1
      %p169 = scmp.eq.s32.totalorder %s23, 3
      %p170 = scmp.ne.s32.totalorder %s165, %s167
      %p171 = scmp.eq.s32.totalorder %s23, 0
      %p172 = por %p170, %p171
      %p173 = scmp.ne.s32.totalorder %s165, %s167
      %p174 = scmp.eq.s32.totalorder %s28, 3
      %p175 = por %p173, %p174
      %p176 = scmp.ne.s32.totalorder %s167, %s168
      %p177 = scmp.eq.s32.totalorder %s28, 0
      %p178 = por %p176, %p177
      %p179 = scmp.ne.s32.totalorder %s167, %s168
      %p180 = scmp.eq.s32.totalorder %s29, 3
      %p181 = por %p179, %p180
      %p183 = scmp.ne.s32.totalorder %s168, %s182
      %p184 = scmp.eq.s32.totalorder %s29, 0
      %p185 = por %p183, %p184
      %s187 = sadd.s32 %s186, 1
      %p190 = scmp.eq.s32.totalorder %s23, 3
      %p191 = scmp.ne.s32.totalorder %s186, %s188
      %p192 = scmp.eq.s32.totalorder %s23, 0
      %p193 = por %p191, %p192
      %p194 = scmp.ne.s32.totalorder %s186, %s188
      %p195 = scmp.eq.s32.totalorder %s28, 3
      %p196 = por %p194, %p195
      %p197 = scmp.ne.s32.totalorder %s188, %s189
      %p198 = scmp.eq.s32.totalorder %s28, 0
      %p199 = por %p197, %p198
      %p200 = scmp.ne.s32.totalorder %s188, %s189
      %p201 = scmp.eq.s32.totalorder %s29, 3
      %p202 = por %p200, %p201
      %p204 = scmp.ne.s32.totalorder %s189, %s203
      %p205 = scmp.eq.s32.totalorder %s29, 0
      %p206 = por %p204, %p205
      %s208 = sadd.s32 %s207, 1
      %p211 = scmp.eq.s32.totalorder %s23, 3
      %p212 = scmp.ne.s32.totalorder %s207, %s209
      %p213 = scmp.eq.s32.totalorder %s23, 0
      %p214 = por %p212, %p213
      %p215 = scmp.ne.s32.totalorder %s207, %s209
      %p216 = scmp.eq.s32.totalorder %s28, 3
      %p217 = por %p215, %p216
      %p218 = scmp.ne.s32.totalorder %s209, %s210
      %p219 = scmp.eq.s32.totalorder %s28, 0
      %p220 = por %p218, %p219
      %p221 = scmp.ne.s32.totalorder %s209, %s210
      %p222 = scmp.eq.s32.totalorder %s29, 3
      %p223 = por %p221, %p222
      %p225 = scmp.ne.s32.totalorder %s210, %s224
      %p226 = scmp.eq.s32.totalorder %s29, 0
      %p227 = por %p225, %p226
      %s229 = sadd.s32 %s228, 1
      %p232 = scmp.eq.s32.totalorder %s23, 3
      %p233 = scmp.ne.s32.totalorder %s228, %s230
      %p234 = scmp.eq.s32.totalorder %s23, 0
      %p235 = por %p233, %p234
      %p236 = scmp.ne.s32.totalorder %s228, %s230
      %p237 = scmp.eq.s32.totalorder %s28, 3
      %p238 = por %p236, %p237
      %p239 = scmp.ne.s32.totalorder %s230, %s231
      %p240 = scmp.eq.s32.totalorder %s28, 0
      %p241 = por %p239, %p240
      %p242 = scmp.ne.s32.totalorder %s230, %s231
      %p243 = scmp.eq.s32.totalorder %s29, 3
      %p244 = por %p242, %p243
      %p246 = scmp.ne.s32.totalorder %s231, %s245
      %p247 = scmp.eq.s32.totalorder %s29, 0
      %p248 = por %p246, %p247
      %s250 = sadd.s32 %s249, 1
      %p253 = scmp.eq.s32.totalorder %s23, 3
      %p254 = scmp.ne.s32.totalorder %s249, %s251
      %p255 = scmp.eq.s32.totalorder %s23, 0
      %p256 = por %p254, %p255
      %p257 = scmp.ne.s32.totalorder %s249, %s251
      %p258 = scmp.eq.s32.totalorder %s28, 3
      %p259 = por %p257, %p258
      %p260 = scmp.ne.s32.totalorder %s251, %s252
      %p261 = scmp.eq.s32.totalorder %s28, 0
      %p262 = por %p260, %p261
      %p263 = scmp.ne.s32.totalorder %s251, %s252
      %p264 = scmp.eq.s32.totalorder %s29, 3
      %p265 = por %p263, %p264
      %p267 = scmp.ne.s32.totalorder %s252, %s266
      %p268 = scmp.eq.s32.totalorder %s29, 0
      %p269 = por %p267, %p268
      %s271 = sadd.s32 %s270, 1
      %p274 = scmp.eq.s32.totalorder %s23, 3
      %p275 = scmp.ne.s32.totalorder %s270, %s272
      %p276 = scmp.eq.s32.totalorder %s23, 0
      %p277 = por %p275, %p276
      %p278 = scmp.ne.s32.totalorder %s270, %s272
      %p279 = scmp.eq.s32.totalorder %s28, 3
      %p280 = por %p278, %p279
      %p281 = scmp.ne.s32.totalorder %s272, %s273
      %p282 = scmp.eq.s32.totalorder %s28, 0
      %p283 = por %p281, %p282
      %p284 = scmp.ne.s32.totalorder %s272, %s273
      %p285 = scmp.eq.s32.totalorder %s29, 3
      %p286 = por %p284, %p285
      %p288 = scmp.ne.s32.totalorder %s273, %s287
      %p289 = scmp.eq.s32.totalorder %s29, 0
      %p290 = por %p288, %p289
      %s292 = sadd.s32 %s291, 1
      %p295 = scmp.eq.s32.totalorder %s23, 3
      %p296 = scmp.ne.s32.totalorder %s291, %s293
      %p297 = scmp.eq.s32.totalorder %s23, 0
      %p298 = por %p296, %p297
      %p299 = scmp.ne.s32.totalorder %s291, %s293
      %p300 = scmp.eq.s32.totalorder %s28, 3
      %p301 = por %p299, %p300
      %p302 = scmp.ne.s32.totalorder %s293, %s294
      %p303 = scmp.eq.s32.totalorder %s28, 0
      %p304 = por %p302, %p303
      %p305 = scmp.ne.s32.totalorder %s293, %s294
      %p306 = scmp.eq.s32.totalorder %s29, 3
      %p307 = por %p305, %p306
      %p309 = scmp.ne.s32.totalorder %s294, %s308
      %p310 = scmp.eq.s32.totalorder %s29, 0
      %p311 = por %p309, %p310
      %s313 = sadd.s32 %s312, 1
      %p316 = scmp.eq.s32.totalorder %s23, 3
      %p317 = scmp.ne.s32.totalorder %s312, %s314
      %p318 = scmp.eq.s32.totalorder %s23, 0
      %p319 = por %p317, %p318
      %p320 = scmp.ne.s32.totalorder %s312, %s314
      %p321 = scmp.eq.s32.totalorder %s28, 3
      %p322 = por %p320, %p321
      %p323 = scmp.ne.s32.totalorder %s314, %s315
      %p324 = scmp.eq.s32.totalorder %s28, 0
      %p325 = por %p323, %p324
      %p326 = scmp.ne.s32.totalorder %s314, %s315
      %p327 = scmp.eq.s32.totalorder %s29, 3
      %p328 = por %p326, %p327
      %p330 = scmp.ne.s32.totalorder %s315, %s329
      %p331 = scmp.eq.s32.totalorder %s29, 0
      %p332 = por %p330, %p331
      %s334 = sadd.s32 %s333, 1
      %p337 = scmp.eq.s32.totalorder %s23, 3
      %p338 = scmp.ne.s32.totalorder %s333, %s335
      %p339 = scmp.eq.s32.totalorder %s23, 0
      %p340 = por %p338, %p339
      %p341 = scmp.ne.s32.totalorder %s333, %s335
      %p342 = scmp.eq.s32.totalorder %s28, 3
      %p343 = por %p341, %p342
      %p344 = scmp.ne.s32.totalorder %s335, %s336
      %p345 = scmp.eq.s32.totalorder %s28, 0
      %p346 = por %p344, %p345
      %p347 = scmp.ne.s32.totalorder %s335, %s336
      %p348 = scmp.eq.s32.totalorder %s29, 3
      %p349 = por %p347, %p348
      %p351 = scmp.ne.s32.totalorder %s336, %s350
      %p352 = scmp.eq.s32.totalorder %s29, 0
      %p353 = por %p351, %p352
      %s354 = ssub.s32 %s30, %s42
      %p355 = scmp.eq.s32.totalorder %s354, 0
      %s357 = sadd.s32 %s356, 1
      %s358 = scalar_select %p355, %s356, %s357
      %p361 = pneg %p355
      %p362 = scmp.eq.s32.totalorder %s23, 3
      %p363 = por %p361, %p362
      %p364 = scmp.ne.s32.totalorder %s356, %s359
      %p365 = scmp.eq.s32.totalorder %s23, 0
      %p366 = por %p364, %p365
      %p367 = scmp.ne.s32.totalorder %s356, %s359
      %p368 = scmp.eq.s32.totalorder %s28, 3
      %p369 = por %p367, %p368
      %p370 = scmp.ne.s32.totalorder %s359, %s360
      %p371 = scmp.eq.s32.totalorder %s28, 0
      %p372 = por %p370, %p371
      %p373 = scmp.ne.s32.totalorder %s359, %s360
      %p374 = scmp.eq.s32.totalorder %s29, 3
      %p375 = por %p373, %p374
      %p377 = scmp.ne.s32.totalorder %s360, %s376
      %p378 = scmp.eq.s32.totalorder %s29, 0
      %p379 = por %p377, %p378
      %p380 = scmp.le.s32.totalorder 1, %s23
      %p381 = scmp.lt.s32.totalorder %s23, 5
      %p382 = pnand %p380, %p381
      %p383 = pneg %p382
      // Predicated region
      $region9: #{tpu_custom_call.1} parent=5 // pred_check
        _
      $region10: #{tpu_custom_call.1} parent=5 // pred_check_branch
        %385 = sbr.rel (%p382) target = $region12
      $region11: #{tpu_custom_call.1} parent=5 // pred_region
        %s386 = ssub.s32 %s23, 1
        // Predicated region
        $region13: #{tpu_custom_call.1} parent=11 // pred_check
          %p387 = pneg %p136
        $region14: #{tpu_custom_call.1} parent=11 // pred_check_branch
          %389 = sbr.rel (%p387) target = $region16
        $region15: #{tpu_custom_call.1} parent=11 // pred_region
          _
        $region16: #{tpu_custom_call.1} parent=11 // pred_fallthru
          _
        // Predicated region
        $region17: #{tpu_custom_call.1} parent=11 // pred_check
          %p390 = pneg %p157
        $region18: #{tpu_custom_call.1} parent=11 // pred_check_branch
          %392 = sbr.rel (%p390) target = $region20
        $region19: #{tpu_custom_call.1} parent=11 // pred_region
          _
        $region20: #{tpu_custom_call.1} parent=11 // pred_fallthru
          _
        // Predicated region
        $region21: #{tpu_custom_call.1} parent=11 // pred_check
          %p393 = pneg %p178
        $region22: #{tpu_custom_call.1} parent=11 // pred_check_branch
          %395 = sbr.rel (%p393) target = $region24
        $region23: #{tpu_custom_call.1} parent=11 // pred_region
          _
        $region24: #{tpu_custom_call.1} parent=11 // pred_fallthru
          _
        // Predicated region
        $region25: #{tpu_custom_call.1} parent=11 // pred_check
          %p396 = pneg %p199
        $region26: #{tpu_custom_call.1} parent=11 // pred_check_branch
          %398 = sbr.rel (%p396) target = $region28
        $region27: #{tpu_custom_call.1} parent=11 // pred_region
          _
        $region28: #{tpu_custom_call.1} parent=11 // pred_fallthru
          _
        // Predicated region
        $region29: #{tpu_custom_call.1} parent=11 // pred_check
          %p399 = pneg %p220
        $region30: #{tpu_custom_call.1} parent=11 // pred_check_branch
          %401 = sbr.rel (%p399) target = $region32
        $region31: #{tpu_custom_call.1} parent=11 // pred_region
          _
        $region32: #{tpu_custom_call.1} parent=11 // pred_fallthru
          _
        // Predicated region
        $region33: #{tpu_custom_call.1} parent=11 // pred_check
          %p402 = pneg %p241
        $region34: #{tpu_custom_call.1} parent=11 // pred_check_branch
          %404 = sbr.rel (%p402) target = $region36
        $region35: #{tpu_custom_call.1} parent=11 // pred_region
          _
        $region36: #{tpu_custom_call.1} parent=11 // pred_fallthru
          _
        // Predicated region
        $region37: #{tpu_custom_call.1} parent=11 // pred_check
          %p405 = pneg %p262
        $region38: #{tpu_custom_call.1} parent=11 // pred_check_branch
          %407 = sbr.rel (%p405) target = $region40
        $region39: #{tpu_custom_call.1} parent=11 // pred_region
          _
        $region40: #{tpu_custom_call.1} parent=11 // pred_fallthru
          _
        // Predicated region
        $region41: #{tpu_custom_call.1} parent=11 // pred_check
          %p408 = pneg %p283
        $region42: #{tpu_custom_call.1} parent=11 // pred_check_branch
          %410 = sbr.rel (%p408) target = $region44
        $region43: #{tpu_custom_call.1} parent=11 // pred_region
          _
        $region44: #{tpu_custom_call.1} parent=11 // pred_fallthru
          _
        // Predicated region
        $region45: #{tpu_custom_call.1} parent=11 // pred_check
          %p411 = pneg %p304
        $region46: #{tpu_custom_call.1} parent=11 // pred_check_branch
          %413 = sbr.rel (%p411) target = $region48
        $region47: #{tpu_custom_call.1} parent=11 // pred_region
          _
        $region48: #{tpu_custom_call.1} parent=11 // pred_fallthru
          _
        // Predicated region
        $region49: #{tpu_custom_call.1} parent=11 // pred_check
          %p414 = pneg %p325
        $region50: #{tpu_custom_call.1} parent=11 // pred_check_branch
          %416 = sbr.rel (%p414) target = $region52
        $region51: #{tpu_custom_call.1} parent=11 // pred_region
          _
        $region52: #{tpu_custom_call.1} parent=11 // pred_fallthru
          _
        // Predicated region
        $region53: #{tpu_custom_call.1} parent=11 // pred_check
          %p417 = pneg %p346
        $region54: #{tpu_custom_call.1} parent=11 // pred_check_branch
          %419 = sbr.rel (%p417) target = $region56
        $region55: #{tpu_custom_call.1} parent=11 // pred_region
          _
        $region56: #{tpu_custom_call.1} parent=11 // pred_fallthru
          _
      $region12: #{tpu_custom_call.1} parent=5 // pred_fallthru
        _
      %p420 = scmp.lt.s32.totalorder %s23, 4
      // Predicated region
      $region57: #{tpu_custom_call.1} parent=5 // pred_check
        %p421 = pneg %p420
      $region58: #{tpu_custom_call.1} parent=5 // pred_check_branch
        %423 = sbr.rel (%p421) target = $region60
      $region59: #{tpu_custom_call.1} parent=5 // pred_region
        // Predicated region
        $region61: #{tpu_custom_call.1} parent=59 // pred_check
          %p424 = pneg %p57
        $region62: #{tpu_custom_call.1} parent=59 // pred_check_branch
          %426 = sbr.rel (%p424) target = $region64
        $region63: #{tpu_custom_call.1} parent=59 // pred_region
          %s427 = sand.u32 %s47, 1
          %s428 = sand.u32 %s47, 1
          %s429 = smul.addr %s428, 64
          %s430 = scalar_lea.vmem [#allocation4], %s429
          %s431 = smul.u32 16, %s30
          %s432 = smul.addr %s431, 2
          %s433 = sadd.s32 %s31, %s432
          %s434 = smul.addr %s433, 4
          %s435 = scalar_lea.vmem %s0, %s434
          // Predicated region
          $region65: #{tpu_custom_call.1} parent=63 // pred_check
            _
          $region66: #{tpu_custom_call.1} parent=63 // pred_check_branch
            %437 = sbr.rel (0) target = $region68
          $region67: #{tpu_custom_call.1} parent=63 // pred_region
            // Predicated region
            $region69: #{tpu_custom_call.1} parent=67 // pred_check
              _
            $region70: #{tpu_custom_call.1} parent=67 // pred_check_branch
              %439 = sbr.rel target = $region72
            $region71: #{tpu_custom_call.1} parent=67 // pred_region
              // Predicated region
              $region84: #{tpu_custom_call.1} parent=71 // pred_check
                _
              $region85: #{tpu_custom_call.1} parent=71 // pred_check_branch
                %485 = sbr.rel (0) target = $region87
              $region86: #{tpu_custom_call.1} parent=71 // pred_region
                loop: start=0, step=1, limit=1
                $region88: #{tpu_custom_call.1} parent=86 // loop_pre_header
                  _
                $region89: #{tpu_custom_call.1} parent=86 // loop_header
                  %s487 = sphi 0, %s491
                  %p488 = scmp.ge.s32.totalorder %s487, 1
                  %s492 = sphi %s435, %s435
                  %s493 = sphi %s430, %s430
                $region90: #{tpu_custom_call.1} parent=86 // loop_header_branch
                  %490 = sbr.rel (%p488) target = $region94
                $region91: #{tpu_custom_call.1} parent=86 // loop_body
                  _
                $region92: #{tpu_custom_call.1} parent=86 // loop_footer
                  %s491 = sadd.s32 1, %s487
                $region93: #{tpu_custom_call.1} parent=86 // loop_footer_branch
                  %486 = sbr.rel target = $region89
                $region94: #{tpu_custom_call.1} parent=86 // loop_exit
                  _
                %s495 = ssub.s32 16, 1
                loop: start=0, step=1, limit=1
                $region95: #{tpu_custom_call.1} parent=86 // loop_pre_header
                  _
                $region96: #{tpu_custom_call.1} parent=86 // loop_header
                  %s497 = sphi 0, %s501
                  %p498 = scmp.ge.s32.totalorder %s497, 1
                  %s502 = sphi %s435, %s435
                  %s503 = sphi %s430, %s430
                $region97: #{tpu_custom_call.1} parent=86 // loop_header_branch
                  %500 = sbr.rel (%p498) target = $region101
                $region98: #{tpu_custom_call.1} parent=86 // loop_body
                  %v504 = vld [vmem:[%s502] sm:%s495]
                  %505 = vst [vmem:[%s503] sm:%s495] %v504
                  %v506 = vld [vmem:[%s502 + $0x8] sm:%s495]
                  %507 = vst [vmem:[%s503 + $0x4] sm:%s495] %v506
                  %v508 = vld [vmem:[%s502 + $0x10] sm:%s495]
                  %509 = vst [vmem:[%s503 + $0x8] sm:%s495] %v508
                  %v510 = vld [vmem:[%s502 + $0x18] sm:%s495]
                  %511 = vst [vmem:[%s503 + $0xc] sm:%s495] %v510
                  %v512 = vld [vmem:[%s502 + $0x20] sm:%s495]
                  %513 = vst [vmem:[%s503 + $0x10] sm:%s495] %v512
                  %v514 = vld [vmem:[%s502 + $0x28] sm:%s495]
                  %515 = vst [vmem:[%s503 + $0x14] sm:%s495] %v514
                  %v516 = vld [vmem:[%s502 + $0x30] sm:%s495]
                  %517 = vst [vmem:[%s503 + $0x18] sm:%s495] %v516
                  %v518 = vld [vmem:[%s502 + $0x38] sm:%s495]
                  %519 = vst [vmem:[%s503 + $0x1c] sm:%s495] %v518
                  %v520 = vld [vmem:[%s502 + $0x40] sm:%s495]
                  %521 = vst [vmem:[%s503 + $0x20] sm:%s495] %v520
                  %v522 = vld [vmem:[%s502 + $0x48] sm:%s495]
                  %523 = vst [vmem:[%s503 + $0x24] sm:%s495] %v522
                  %v524 = vld [vmem:[%s502 + $0x50] sm:%s495]
                  %525 = vst [vmem:[%s503 + $0x28] sm:%s495] %v524
                  %v526 = vld [vmem:[%s502 + $0x58] sm:%s495]
                  %527 = vst [vmem:[%s503 + $0x2c] sm:%s495] %v526
                  %v528 = vld [vmem:[%s502 + $0x60] sm:%s495]
                  %529 = vst [vmem:[%s503 + $0x30] sm:%s495] %v528
                  %v530 = vld [vmem:[%s502 + $0x68] sm:%s495]
                  %531 = vst [vmem:[%s503 + $0x34] sm:%s495] %v530
                  %v532 = vld [vmem:[%s502 + $0x70] sm:%s495]
                  %533 = vst [vmem:[%s503 + $0x38] sm:%s495] %v532
                  %v534 = vld [vmem:[%s502 + $0x78] sm:%s495]
                  %535 = vst [vmem:[%s503 + $0x3c] sm:%s495] %v534
                $region99: #{tpu_custom_call.1} parent=86 // loop_footer
                  %s501 = sadd.s32 1, %s497
                $region100: #{tpu_custom_call.1} parent=86 // loop_footer_branch
                  %496 = sbr.rel target = $region96
                $region101: #{tpu_custom_call.1} parent=86 // loop_exit
                  _
              $region87: #{tpu_custom_call.1} parent=71 // pred_fallthru
                _
            $region72: #{tpu_custom_call.1} parent=67 // pred_fallthru
              _
            // Predicated region
            $region73: #{tpu_custom_call.1} parent=67 // pred_check
              _
            $region74: #{tpu_custom_call.1} parent=67 // pred_check_branch
              %441 = sbr.rel (0) target = $region76
            $region75: #{tpu_custom_call.1} parent=67 // pred_region
              %s443 = ssub.s32 16, 1
              loop: start=0, step=1, limit=1
              $region77: #{tpu_custom_call.1} parent=75 // loop_pre_header
                _
              $region78: #{tpu_custom_call.1} parent=75 // loop_header
                %s445 = sphi 0, %s449
                %p446 = scmp.ge.s32.totalorder %s445, 1
                %s450 = sphi %s435, %s435
                %s451 = sphi %s430, %s430
              $region79: #{tpu_custom_call.1} parent=75 // loop_header_branch
                %448 = sbr.rel (%p446) target = $region83
              $region80: #{tpu_custom_call.1} parent=75 // loop_body
                %v452 = vld [vmem:[%s450] sm:%s443]
                %453 = vst [vmem:[%s451] sm:%s443] %v452
                %v454 = vld [vmem:[%s450 + $0x8] sm:%s443]
                %455 = vst [vmem:[%s451 + $0x4] sm:%s443] %v454
                %v456 = vld [vmem:[%s450 + $0x10] sm:%s443]
                %457 = vst [vmem:[%s451 + $0x8] sm:%s443] %v456
                %v458 = vld [vmem:[%s450 + $0x18] sm:%s443]
                %459 = vst [vmem:[%s451 + $0xc] sm:%s443] %v458
                %v460 = vld [vmem:[%s450 + $0x20] sm:%s443]
                %461 = vst [vmem:[%s451 + $0x10] sm:%s443] %v460
                %v462 = vld [vmem:[%s450 + $0x28] sm:%s443]
                %463 = vst [vmem:[%s451 + $0x14] sm:%s443] %v462
                %v464 = vld [vmem:[%s450 + $0x30] sm:%s443]
                %465 = vst [vmem:[%s451 + $0x18] sm:%s443] %v464
                %v466 = vld [vmem:[%s450 + $0x38] sm:%s443]
                %467 = vst [vmem:[%s451 + $0x1c] sm:%s443] %v466
                %v468 = vld [vmem:[%s450 + $0x40] sm:%s443]
                %469 = vst [vmem:[%s451 + $0x20] sm:%s443] %v468
                %v470 = vld [vmem:[%s450 + $0x48] sm:%s443]
                %471 = vst [vmem:[%s451 + $0x24] sm:%s443] %v470
                %v472 = vld [vmem:[%s450 + $0x50] sm:%s443]
                %473 = vst [vmem:[%s451 + $0x28] sm:%s443] %v472
                %v474 = vld [vmem:[%s450 + $0x58] sm:%s443]
                %475 = vst [vmem:[%s451 + $0x2c] sm:%s443] %v474
                %v476 = vld [vmem:[%s450 + $0x60] sm:%s443]
                %477 = vst [vmem:[%s451 + $0x30] sm:%s443] %v476
                %v478 = vld [vmem:[%s450 + $0x68] sm:%s443]
                %479 = vst [vmem:[%s451 + $0x34] sm:%s443] %v478
                %v480 = vld [vmem:[%s450 + $0x70] sm:%s443]
                %481 = vst [vmem:[%s451 + $0x38] sm:%s443] %v480
                %v482 = vld [vmem:[%s450 + $0x78] sm:%s443]
                %483 = vst [vmem:[%s451 + $0x3c] sm:%s443] %v482
              $region81: #{tpu_custom_call.1} parent=75 // loop_footer
                %s449 = sadd.s32 1, %s445
              $region82: #{tpu_custom_call.1} parent=75 // loop_footer_branch
                %444 = sbr.rel target = $region78
              $region83: #{tpu_custom_call.1} parent=75 // loop_exit
                _
            $region76: #{tpu_custom_call.1} parent=67 // pred_fallthru
              _
          $region68: #{tpu_custom_call.1} parent=63 // pred_fallthru
            _
          %536 = vnop
        $region64: #{tpu_custom_call.1} parent=59 // pred_fallthru
          _
        // Predicated region
        $region102: #{tpu_custom_call.1} parent=59 // pred_check
          %p537 = pneg %p83
        $region103: #{tpu_custom_call.1} parent=59 // pred_check_branch
          %539 = sbr.rel (%p537) target = $region105
        $region104: #{tpu_custom_call.1} parent=59 // pred_region
          %s540 = smul.u32 16, %s30
          %p541 = scmp.lt.s32.totalorder %s540, 31
          %s542 = scalar_select %p541, %s540, 31
          %s543 = smul.addr %s542, 4
          %s544 = scalar_lea.vmem %s1, %s543
          %s545 = smul.u32 16, %s30
        $region105: #{tpu_custom_call.1} parent=59 // pred_fallthru
          _
        // Predicated region
        $region106: #{tpu_custom_call.1} parent=59 // pred_check
          %p546 = pneg %p109
        $region107: #{tpu_custom_call.1} parent=59 // pred_check_branch
          %548 = sbr.rel (%p546) target = $region109
        $region108: #{tpu_custom_call.1} parent=59 // pred_region
          %s549 = smul.u32 16, %s31
          %p550 = scmp.lt.s32.totalorder %s549, 31
          %s551 = scalar_select %p550, %s549, 31
          %s552 = smul.addr %s551, 4
          %s553 = scalar_lea.vmem %s2, %s552
          %s554 = smul.u32 16, %s31
        $region109: #{tpu_custom_call.1} parent=59 // pred_fallthru
          _
      $region60: #{tpu_custom_call.1} parent=5 // pred_fallthru
        _
      %p555 = scmp.le.s32.totalorder 1, %s23
      %p556 = scmp.lt.s32.totalorder %s23, 5
      %p557 = pnand %p555, %p556
      %p558 = pneg %p557
      // Predicated region
      $region110: #{tpu_custom_call.1} parent=5 // pred_check
        _
      $region111: #{tpu_custom_call.1} parent=5 // pred_check_branch
        %560 = sbr.rel (%p557) target = $region113
      $region112: #{tpu_custom_call.1} parent=5 // pred_region
        %s561 = ssub.s32 %s23, 1
        %s562 = sand.u32 %s50, 1
        %s563 = sand.u32 %s50, 1
        %s564 = smul.addr %s563, 64
        %s565 = scalar_lea.vmem [#allocation4], %s564
        // Predicated region
        $region114: #{tpu_custom_call.1} parent=112 // pred_check
          %p566 = pneg %p63
        $region115: #{tpu_custom_call.1} parent=112 // pred_check_branch
          %568 = sbr.rel (%p566) target = $region117
        $region116: #{tpu_custom_call.1} parent=112 // pred_region
          _
        $region117: #{tpu_custom_call.1} parent=112 // pred_fallthru
          _
        %s569 = sand.u32 %s50, 1
        %s570 = sand.u32 %s50, 1
        %s571 = smul.addr %s570, 64
        %s572 = scalar_lea.vmem [#allocation4], %s571
        %p573 = pneg %p63
        %p574 = pneg %p60
        %s575 = smul.u32 16, %s32
        %p576 = scmp.lt.s32.totalorder %s575, 31
        %s577 = scalar_select %p576, %s575, 31
        %s578 = smul.addr %s577, 4
        %s579 = scalar_lea.vmem %s1, %s578
        %p580 = pneg %p89
        %p581 = pneg %p86
        %s582 = smul.u32 16, %s33
        %p583 = scmp.lt.s32.totalorder %s582, 31
        %s584 = scalar_select %p583, %s582, 31
        %s585 = smul.addr %s584, 4
        %s586 = scalar_lea.vmem %s2, %s585
        %p587 = pneg %p115
        %p588 = pneg %p112
        %p589 = pneg %p136
        %p590 = pneg %p133
        %p591 = pneg %p157
        %p592 = pneg %p154
        %p593 = pneg %p178
        %p594 = pneg %p175
        %p595 = pneg %p199
        %p596 = pneg %p196
        %p597 = pneg %p220
        %p598 = pneg %p217
        %p599 = pneg %p241
        %p600 = pneg %p238
        %p601 = pneg %p262
        %p602 = pneg %p259
        %p603 = pneg %p283
        %p604 = pneg %p280
        %p605 = pneg %p304
        %p606 = pneg %p301
        %p607 = pneg %p325
        %p608 = pneg %p322
        %p609 = pneg %p346
        %p610 = pneg %p343
        %p611 = pneg %p372
        %p612 = pneg %p369
        %s613 = sand.u32 %s359, 1
        %s614 = scalar_lea.sflag [#allocation6], %s613
        %s615 = sand.u32 %s359, 1
        %s616 = smul.addr %s615, 128
        %s617 = scalar_lea.vmem [#allocation5], %s616
        %s618 = smul.u32 16, %s32
        %s619 = smul.u32 16, %s32
        %p620 = scmp.lt.s32.totalorder %s619, 31
        %s621 = scalar_select %p620, %s619, 31
        %s622 = smul.addr %s621, 4
        %s623 = scalar_lea.vmem %s1, %s622
        %s624 = smul.u32 16, %s32
        %s625 = smul.u32 16, %s33
        %p626 = scmp.lt.s32.totalorder %s625, 31
        %s627 = scalar_select %p626, %s625, 31
        %s628 = smul.addr %s627, 4
        %s629 = scalar_lea.vmem %s2, %s628
        %s630 = smul.u32 16, %s33
        %s631 = smul.u32 16, %s32
        %p633 = scmp.eq.s32.totalorder %s33, 0
        // Predicated region
        $region118: #{tpu_custom_call.1} parent=112 // pred_check
          %p634 = pneg %p633
        $region119: #{tpu_custom_call.1} parent=112 // pred_check_branch
          %636 = sbr.rel (%p634) target = $region121
        $region120: #{tpu_custom_call.1} parent=112 // pred_region
          %vm637 = vcmask 261120
          %638 = vst.msk [vmem:[#allocation2] sm:$0xff] %vm637, 0.0
          %639 = vst.msk [vmem:[#allocation2 + $0x8] sm:$0xff] %vm637, 0.0
          %640 = vst.msk [vmem:[#allocation2 + $0x10] sm:$0xff] %vm637, 0.0
          %641 = vst.msk [vmem:[#allocation2 + $0x18] sm:$0xff] %vm637, 0.0
          %642 = vst.msk [vmem:[#allocation2 + $0x20] sm:$0xff] %vm637, 0.0
          %643 = vst.msk [vmem:[#allocation2 + $0x28] sm:$0xff] %vm637, 0.0
          %644 = vst.msk [vmem:[#allocation2 + $0x30] sm:$0xff] %vm637, 0.0
          %645 = vst.msk [vmem:[#allocation2 + $0x38] sm:$0xff] %vm637, 0.0
          %646 = vst.msk [vmem:[#allocation2 + $0x40] sm:$0xff] %vm637, 0.0
          %647 = vst.msk [vmem:[#allocation2 + $0x48] sm:$0xff] %vm637, 0.0
          %648 = vst.msk [vmem:[#allocation2 + $0x50] sm:$0xff] %vm637, 0.0
          %649 = vst.msk [vmem:[#allocation2 + $0x58] sm:$0xff] %vm637, 0.0
          %650 = vst.msk [vmem:[#allocation2 + $0x60] sm:$0xff] %vm637, 0.0
          %651 = vst.msk [vmem:[#allocation2 + $0x68] sm:$0xff] %vm637, 0.0
          %652 = vst.msk [vmem:[#allocation2 + $0x70] sm:$0xff] %vm637, 0.0
          %653 = vst.msk [vmem:[#allocation2 + $0x78] sm:$0xff] %vm637, 0.0
        $region121: #{tpu_custom_call.1} parent=112 // pred_fallthru
          _
        %v654 = vld [vmem:[#allocation2] sm:$0xff]
        %v655 = vld [vmem:[#allocation2 + $0x8] sm:$0xff]
        %v656 = vld [vmem:[#allocation2 + $0x10] sm:$0xff]
        %v657 = vld [vmem:[#allocation2 + $0x18] sm:$0xff]
        %v658 = vld [vmem:[#allocation2 + $0x20] sm:$0xff]
        %v659 = vld [vmem:[#allocation2 + $0x28] sm:$0xff]
        %v660 = vld [vmem:[#allocation2 + $0x30] sm:$0xff]
        %v661 = vld [vmem:[#allocation2 + $0x38] sm:$0xff]
        %v662 = vld [vmem:[#allocation2 + $0x40] sm:$0xff]
        %v663 = vld [vmem:[#allocation2 + $0x48] sm:$0xff]
        %v664 = vld [vmem:[#allocation2 + $0x50] sm:$0xff]
        %v665 = vld [vmem:[#allocation2 + $0x58] sm:$0xff]
        %v666 = vld [vmem:[#allocation2 + $0x60] sm:$0xff]
        %v667 = vld [vmem:[#allocation2 + $0x68] sm:$0xff]
        %v668 = vld [vmem:[#allocation2 + $0x70] sm:$0xff]
        %v669 = vld [vmem:[#allocation2 + $0x78] sm:$0xff]
        %v670 = vld [vmem:[%s565] sm:$0xf]
        %v671 = vld [vmem:[%s565 + $0x4] sm:$0xf]
        %v672 = vld [vmem:[%s565 + $0x8] sm:$0xf]
        %v673 = vld [vmem:[%s565 + $0xc] sm:$0xf]
        %v674 = vld [vmem:[%s565 + $0x10] sm:$0xf]
        %v675 = vld [vmem:[%s565 + $0x14] sm:$0xf]
        %v676 = vld [vmem:[%s565 + $0x18] sm:$0xf]
        %v677 = vld [vmem:[%s565 + $0x1c] sm:$0xf]
        %v678 = vld [vmem:[%s565 + $0x20] sm:$0xf]
        %v679 = vld [vmem:[%s565 + $0x24] sm:$0xf]
        %v680 = vld [vmem:[%s565 + $0x28] sm:$0xf]
        %v681 = vld [vmem:[%s565 + $0x2c] sm:$0xf]
        %v682 = vld [vmem:[%s565 + $0x30] sm:$0xf]
        %v683 = vld [vmem:[%s565 + $0x34] sm:$0xf]
        %v684 = vld [vmem:[%s565 + $0x38] sm:$0xf]
        %v685 = vld [vmem:[%s565 + $0x3c] sm:$0xf]
        %v686 = vld [vmem:[%s629] sm:$0xf]
        %v687 = vld [vmem:[%s629 + $0x4] sm:$0xf]
        %v688 = vld [vmem:[%s629 + $0x8] sm:$0xf]
        %v689 = vld [vmem:[%s629 + $0xc] sm:$0xf]
        %v690 = vld [vmem:[%s629 + $0x10] sm:$0xf]
        %v691 = vld [vmem:[%s629 + $0x14] sm:$0xf]
        %v692 = vld [vmem:[%s629 + $0x18] sm:$0xf]
        %v693 = vld [vmem:[%s629 + $0x1c] sm:$0xf]
        %v694 = vld [vmem:[%s629 + $0x20] sm:$0xf]
        %v695 = vld [vmem:[%s629 + $0x24] sm:$0xf]
        %v696 = vld [vmem:[%s629 + $0x28] sm:$0xf]
        %v697 = vld [vmem:[%s629 + $0x2c] sm:$0xf]
        %v698 = vld [vmem:[%s629 + $0x30] sm:$0xf]
        %v699 = vld [vmem:[%s629 + $0x34] sm:$0xf]
        %v700 = vld [vmem:[%s629 + $0x38] sm:$0xf]
        %v701 = vld [vmem:[%s629 + $0x3c] sm:$0xf]
        %v718 = vunpack.c.l.b16 %v670
        %v719 = vunpack.c.l.b16 %v671
        %v720 = vunpack.c.l.b16 %v672
        %v721 = vunpack.c.l.b16 %v673
        %v722 = vunpack.c.l.b16 %v674
        %v723 = vunpack.c.l.b16 %v675
        %v724 = vunpack.c.l.b16 %v676
        %v725 = vunpack.c.l.b16 %v677
        %v726 = vunpack.c.l.b16 %v678
        %v727 = vunpack.c.l.b16 %v679
        %v728 = vunpack.c.l.b16 %v680
        %v729 = vunpack.c.l.b16 %v681
        %v730 = vunpack.c.l.b16 %v682
        %v731 = vunpack.c.l.b16 %v683
        %v732 = vunpack.c.l.b16 %v684
        %v733 = vunpack.c.l.b16 %v685
        %v734 = vpack.c.b16 %v719, %v718
        %v735 = vpack.c.b16 %v721, %v720
        %v736 = vpack.c.b16 %v723, %v722
        %v737 = vpack.c.b16 %v725, %v724
        %v738 = vpack.c.b16 %v727, %v726
        %v739 = vpack.c.b16 %v729, %v728
        %v740 = vpack.c.b16 %v731, %v730
        %v741 = vpack.c.b16 %v733, %v732
        %v766 = vunpack.c.l.b16 %v686
        %v767 = vunpack.c.l.b16 %v687
        %v768 = vunpack.c.l.b16 %v688
        %v769 = vunpack.c.l.b16 %v689
        %v770 = vunpack.c.l.b16 %v690
        %v771 = vunpack.c.l.b16 %v691
        %v772 = vunpack.c.l.b16 %v692
        %v773 = vunpack.c.l.b16 %v693
        %v774 = vunpack.c.l.b16 %v694
        %v775 = vunpack.c.l.b16 %v695
        %v776 = vunpack.c.l.b16 %v696
        %v777 = vunpack.c.l.b16 %v697
        %v778 = vunpack.c.l.b16 %v698
        %v779 = vunpack.c.l.b16 %v699
        %v780 = vunpack.c.l.b16 %v700
        %v781 = vunpack.c.l.b16 %v701
        %v782 = vpack.c.b16 %v767, %v766
        %v783 = vpack.c.b16 %v769, %v768
        %v784 = vpack.c.b16 %v771, %v770
        %v785 = vpack.c.b16 %v773, %v772
        %v786 = vpack.c.b16 %v775, %v774
        %v787 = vpack.c.b16 %v777, %v776
        %v788 = vpack.c.b16 %v779, %v778
        %v789 = vpack.c.b16 %v781, %v780
        %798 = vmatpush.bf16.msra.mxu0 %v789
        %799 = vmatpush.bf16.msra.mxu0 %v788
        %800 = vmatpush.bf16.msra.mxu0 %v787
        %801 = vmatpush.bf16.msra.mxu0 %v786
        %802 = vmatpush.bf16.msra.mxu0 %v785
        %803 = vmatpush.bf16.msra.mxu0 %v784
        %804 = vmatpush.bf16.msra.mxu0 %v783
        %805 = vmatpush.bf16.msra.mxu0 %v782
        %806 = vmatmul.bf16.gmra.mxu0 %v734
        %v807 = vpop.f32.mrf.mxu0
        %v808 = vadd.f32 0.0, %v807
        %v809 = vpop.f32.mrf.mxu0
        %v810 = vadd.f32 0.0, %v809
        %811 = vmatmul.bf16.gmra.mxu0 %v735
        %v812 = vpop.f32.mrf.mxu0
        %v813 = vadd.f32 0.0, %v812
        %v814 = vpop.f32.mrf.mxu0
        %v815 = vadd.f32 0.0, %v814
        %816 = vmatmul.bf16.gmra.mxu0 %v736
        %v817 = vpop.f32.mrf.mxu0
        %v818 = vadd.f32 0.0, %v817
        %v819 = vpop.f32.mrf.mxu0
        %v820 = vadd.f32 0.0, %v819
        %821 = vmatmul.bf16.gmra.mxu0 %v737
        %v822 = vpop.f32.mrf.mxu0
        %v823 = vadd.f32 0.0, %v822
        %v824 = vpop.f32.mrf.mxu0
        %v825 = vadd.f32 0.0, %v824
        %826 = vmatmul.bf16.gmra.mxu0 %v738
        %v827 = vpop.f32.mrf.mxu0
        %v828 = vadd.f32 0.0, %v827
        %v829 = vpop.f32.mrf.mxu0
        %v830 = vadd.f32 0.0, %v829
        %831 = vmatmul.bf16.gmra.mxu0 %v739
        %v832 = vpop.f32.mrf.mxu0
        %v833 = vadd.f32 0.0, %v832
        %v834 = vpop.f32.mrf.mxu0
        %v835 = vadd.f32 0.0, %v834
        %836 = vmatmul.bf16.gmra.mxu0 %v740
        %v837 = vpop.f32.mrf.mxu0
        %v838 = vadd.f32 0.0, %v837
        %v839 = vpop.f32.mrf.mxu0
        %v840 = vadd.f32 0.0, %v839
        %841 = vmatmul.bf16.gmra.mxu0 %v741
        %v842 = vpop.f32.mrf.mxu0
        %v843 = vadd.f32 0.0, %v842
        %v844 = vpop.f32.mrf.mxu0
        %v845 = vadd.f32 0.0, %v844
        %846 = vdwg.mxu0
        %v847 = vadd.f32 %v654, %v808
        %v848 = vadd.f32 %v655, %v810
        %v849 = vadd.f32 %v656, %v813
        %v850 = vadd.f32 %v657, %v815
        %v851 = vadd.f32 %v658, %v818
        %v852 = vadd.f32 %v659, %v820
        %v853 = vadd.f32 %v660, %v823
        %v854 = vadd.f32 %v661, %v825
        %v855 = vadd.f32 %v662, %v828
        %v856 = vadd.f32 %v663, %v830
        %v857 = vadd.f32 %v664, %v833
        %v858 = vadd.f32 %v665, %v835
        %v859 = vadd.f32 %v666, %v838
        %v860 = vadd.f32 %v667, %v840
        %v861 = vadd.f32 %v668, %v843
        %v862 = vadd.f32 %v669, %v845
        %vm863 = vcmask 261120
        %864 = vst.msk [vmem:[#allocation2] sm:$0xff] %vm863, %v847
        %865 = vst.msk [vmem:[#allocation2 + $0x8] sm:$0xff] %vm863, %v848
        %866 = vst.msk [vmem:[#allocation2 + $0x10] sm:$0xff] %vm863, %v849
        %867 = vst.msk [vmem:[#allocation2 + $0x18] sm:$0xff] %vm863, %v850
        %868 = vst.msk [vmem:[#allocation2 + $0x20] sm:$0xff] %vm863, %v851
        %869 = vst.msk [vmem:[#allocation2 + $0x28] sm:$0xff] %vm863, %v852
        %870 = vst.msk [vmem:[#allocation2 + $0x30] sm:$0xff] %vm863, %v853
        %871 = vst.msk [vmem:[#allocation2 + $0x38] sm:$0xff] %vm863, %v854
        %872 = vst.msk [vmem:[#allocation2 + $0x40] sm:$0xff] %vm863, %v855
        %873 = vst.msk [vmem:[#allocation2 + $0x48] sm:$0xff] %vm863, %v856
        %874 = vst.msk [vmem:[#allocation2 + $0x50] sm:$0xff] %vm863, %v857
        %875 = vst.msk [vmem:[#allocation2 + $0x58] sm:$0xff] %vm863, %v858
        %876 = vst.msk [vmem:[#allocation2 + $0x60] sm:$0xff] %vm863, %v859
        %877 = vst.msk [vmem:[#allocation2 + $0x68] sm:$0xff] %vm863, %v860
        %878 = vst.msk [vmem:[#allocation2 + $0x70] sm:$0xff] %vm863, %v861
        %879 = vst.msk [vmem:[#allocation2 + $0x78] sm:$0xff] %vm863, %v862
        %p880 = scmp.eq.s32.totalorder %s33, 1
        // Predicated region
        $region122: #{tpu_custom_call.1} parent=112 // pred_check
          %p881 = pneg %p880
        $region123: #{tpu_custom_call.1} parent=112 // pred_check_branch
          %883 = sbr.rel (%p881) target = $region125
        $region124: #{tpu_custom_call.1} parent=112 // pred_region
          %v884 = vld [vmem:[#allocation2] sm:$0xff]
          %v885 = vld [vmem:[#allocation2 + $0x8] sm:$0xff]
          %v886 = vld [vmem:[#allocation2 + $0x10] sm:$0xff]
          %v887 = vld [vmem:[#allocation2 + $0x18] sm:$0xff]
          %v888 = vld [vmem:[#allocation2 + $0x20] sm:$0xff]
          %v889 = vld [vmem:[#allocation2 + $0x28] sm:$0xff]
          %v890 = vld [vmem:[#allocation2 + $0x30] sm:$0xff]
          %v891 = vld [vmem:[#allocation2 + $0x38] sm:$0xff]
          %v892 = vld [vmem:[#allocation2 + $0x40] sm:$0xff]
          %v893 = vld [vmem:[#allocation2 + $0x48] sm:$0xff]
          %v894 = vld [vmem:[#allocation2 + $0x50] sm:$0xff]
          %v895 = vld [vmem:[#allocation2 + $0x58] sm:$0xff]
          %v896 = vld [vmem:[#allocation2 + $0x60] sm:$0xff]
          %v897 = vld [vmem:[#allocation2 + $0x68] sm:$0xff]
          %v898 = vld [vmem:[#allocation2 + $0x70] sm:$0xff]
          %v899 = vld [vmem:[#allocation2 + $0x78] sm:$0xff]
          %v900 = vld [vmem:[%s3] sm:$0x1]
          %v902 = vperm.slane %v900, 0
          %v904 = vadd.f32 %v884, %v902
          %v905 = vadd.f32 %v885, %v902
          %v906 = vadd.f32 %v886, %v902
          %v907 = vadd.f32 %v887, %v902
          %v908 = vadd.f32 %v888, %v902
          %v909 = vadd.f32 %v889, %v902
          %v910 = vadd.f32 %v890, %v902
          %v911 = vadd.f32 %v891, %v902
          %v912 = vadd.f32 %v892, %v902
          %v913 = vadd.f32 %v893, %v902
          %v914 = vadd.f32 %v894, %v902
          %v915 = vadd.f32 %v895, %v902
          %v916 = vadd.f32 %v896, %v902
          %v917 = vadd.f32 %v897, %v902
          %v918 = vadd.f32 %v898, %v902
          %v919 = vadd.f32 %v899, %v902
          %v920 = vld [vmem:[%s623] sm:$0xf]
          %v921 = vld [vmem:[%s623 + $0x4] sm:$0xf]
          %v922 = vld [vmem:[%s623 + $0x8] sm:$0xf]
          %v923 = vld [vmem:[%s623 + $0xc] sm:$0xf]
          %v924 = vld [vmem:[%s623 + $0x10] sm:$0xf]
          %v925 = vld [vmem:[%s623 + $0x14] sm:$0xf]
          %v926 = vld [vmem:[%s623 + $0x18] sm:$0xf]
          %v927 = vld [vmem:[%s623 + $0x1c] sm:$0xf]
          %v928 = vld [vmem:[%s623 + $0x20] sm:$0xf]
          %v929 = vld [vmem:[%s623 + $0x24] sm:$0xf]
          %v930 = vld [vmem:[%s623 + $0x28] sm:$0xf]
          %v931 = vld [vmem:[%s623 + $0x2c] sm:$0xf]
          %v932 = vld [vmem:[%s623 + $0x30] sm:$0xf]
          %v933 = vld [vmem:[%s623 + $0x34] sm:$0xf]
          %v934 = vld [vmem:[%s623 + $0x38] sm:$0xf]
          %v935 = vld [vmem:[%s623 + $0x3c] sm:$0xf]
          %v936 = vld [vmem:[%s4] sm:$0xf]
          %v937 = vld [vmem:[%s4 + $0x4] sm:$0xf]
          %v938 = vld [vmem:[%s5] sm:$0x1]
          %v940 = vperm.slane %v938, 0
          %v958 = vunpack.c.l.b16 %v920
          %v959 = vunpack.c.l.b16 %v921
          %v960 = vunpack.c.l.b16 %v922
          %v961 = vunpack.c.l.b16 %v923
          %v962 = vunpack.c.l.b16 %v924
          %v963 = vunpack.c.l.b16 %v925
          %v964 = vunpack.c.l.b16 %v926
          %v965 = vunpack.c.l.b16 %v927
          %v966 = vunpack.c.l.b16 %v928
          %v967 = vunpack.c.l.b16 %v929
          %v968 = vunpack.c.l.b16 %v930
          %v969 = vunpack.c.l.b16 %v931
          %v970 = vunpack.c.l.b16 %v932
          %v971 = vunpack.c.l.b16 %v933
          %v972 = vunpack.c.l.b16 %v934
          %v973 = vunpack.c.l.b16 %v935
          %v974 = vpack.c.b16 %v959, %v958
          %v975 = vpack.c.b16 %v961, %v960
          %v976 = vpack.c.b16 %v963, %v962
          %v977 = vpack.c.b16 %v965, %v964
          %v978 = vpack.c.b16 %v967, %v966
          %v979 = vpack.c.b16 %v969, %v968
          %v980 = vpack.c.b16 %v971, %v970
          %v981 = vpack.c.b16 %v973, %v972
          %v984 = vunpack.c.l.b16 %v936
          %v985 = vunpack.c.l.b16 %v937
          %v986 = vpack.c.b16 %v985, %v984
          %vm988 = vcmask 130048
          %v990 = vsel %vm988, %v974, 0
          %v993 = vsel %vm988, %v975, 0
          %v996 = vsel %vm988, %v976, 0
          %v999 = vsel %vm988, %v977, 0
          %v1002 = vsel %vm988, %v978, 0
          %v1005 = vsel %vm988, %v979, 0
          %v1008 = vsel %vm988, %v980, 0
          %v1011 = vsel %vm988, %v981, 0
          %1013 = vmatpush.bf16.msra.mxu0 0
          %1014 = vmatpush.bf16.msra.mxu0 0
          %1015 = vmatpush.bf16.msra.mxu0 0
          %1016 = vmatpush.bf16.msra.mxu0 0
          %1017 = vmatpush.bf16.msra.mxu0 0
          %1018 = vmatpush.bf16.msra.mxu0 0
          %1019 = vmatpush.bf16.msra.mxu0 0
          %1020 = vmatpush.bf16.msra.mxu0 %v986
          %1021 = vmatmul.bf16.gmra.mxu0 %v990
          %v1022 = vpop.f32.mrf.mxu0
          %v1023 = vadd.f32 %v940, %v1022
          %v1024 = vpop.f32.mrf.mxu0
          %v1025 = vadd.f32 %v940, %v1024
          %1026 = vmatmul.bf16.gmra.mxu0 %v993
          %v1027 = vpop.f32.mrf.mxu0
          %v1028 = vadd.f32 %v940, %v1027
          %v1029 = vpop.f32.mrf.mxu0
          %v1030 = vadd.f32 %v940, %v1029
          %1031 = vmatmul.bf16.gmra.mxu0 %v996
          %v1032 = vpop.f32.mrf.mxu0
          %v1033 = vadd.f32 %v940, %v1032
          %v1034 = vpop.f32.mrf.mxu0
          %v1035 = vadd.f32 %v940, %v1034
          %1036 = vmatmul.bf16.gmra.mxu0 %v999
          %v1037 = vpop.f32.mrf.mxu0
          %v1038 = vadd.f32 %v940, %v1037
          %v1039 = vpop.f32.mrf.mxu0
          %v1040 = vadd.f32 %v940, %v1039
          %1041 = vmatmul.bf16.gmra.mxu0 %v1002
          %v1042 = vpop.f32.mrf.mxu0
          %v1043 = vadd.f32 %v940, %v1042
          %v1044 = vpop.f32.mrf.mxu0
          %v1045 = vadd.f32 %v940, %v1044
          %1046 = vmatmul.bf16.gmra.mxu0 %v1005
          %v1047 = vpop.f32.mrf.mxu0
          %v1048 = vadd.f32 %v940, %v1047
          %v1049 = vpop.f32.mrf.mxu0
          %v1050 = vadd.f32 %v940, %v1049
          %1051 = vmatmul.bf16.gmra.mxu0 %v1008
          %v1052 = vpop.f32.mrf.mxu0
          %v1053 = vadd.f32 %v940, %v1052
          %v1054 = vpop.f32.mrf.mxu0
          %v1055 = vadd.f32 %v940, %v1054
          %1056 = vmatmul.bf16.gmra.mxu0 %v1011
          %v1057 = vpop.f32.mrf.mxu0
          %v1058 = vadd.f32 %v940, %v1057
          %v1059 = vpop.f32.mrf.mxu0
          %v1060 = vadd.f32 %v940, %v1059
          %1061 = vdwg.mxu0
          %v1062 = vpack.c.bf16 %v904, %v904
          %v1063 = vpack.c.bf16 %v905, %v905
          %v1064 = vpack.c.bf16 %v906, %v906
          %v1065 = vpack.c.bf16 %v907, %v907
          %v1066 = vpack.c.bf16 %v908, %v908
          %v1067 = vpack.c.bf16 %v909, %v909
          %v1068 = vpack.c.bf16 %v910, %v910
          %v1069 = vpack.c.bf16 %v911, %v911
          %v1070 = vpack.c.bf16 %v912, %v912
          %v1071 = vpack.c.bf16 %v913, %v913
          %v1072 = vpack.c.bf16 %v914, %v914
          %v1073 = vpack.c.bf16 %v915, %v915
          %v1074 = vpack.c.bf16 %v916, %v916
          %v1075 = vpack.c.bf16 %v917, %v917
          %v1076 = vpack.c.bf16 %v918, %v918
          %v1077 = vpack.c.bf16 %v919, %v919
          %vm1078 = vcmask 257024
          %1079 = vst.msk [vmem:[#allocation3] sm:$0xf] %vm1078, %v1062
          %1080 = vst.msk [vmem:[#allocation3 + $0x4] sm:$0xf] %vm1078, %v1063
          %1081 = vst.msk [vmem:[#allocation3 + $0x8] sm:$0xf] %vm1078, %v1064
          %1082 = vst.msk [vmem:[#allocation3 + $0xc] sm:$0xf] %vm1078, %v1065
          %1083 = vst.msk [vmem:[#allocation3 + $0x10] sm:$0xf] %vm1078, %v1066
          %1084 = vst.msk [vmem:[#allocation3 + $0x14] sm:$0xf] %vm1078, %v1067
          %1085 = vst.msk [vmem:[#allocation3 + $0x18] sm:$0xf] %vm1078, %v1068
          %1086 = vst.msk [vmem:[#allocation3 + $0x1c] sm:$0xf] %vm1078, %v1069
          %1087 = vst.msk [vmem:[#allocation3 + $0x20] sm:$0xf] %vm1078, %v1070
          %1088 = vst.msk [vmem:[#allocation3 + $0x24] sm:$0xf] %vm1078, %v1071
          %1089 = vst.msk [vmem:[#allocation3 + $0x28] sm:$0xf] %vm1078, %v1072
          %1090 = vst.msk [vmem:[#allocation3 + $0x2c] sm:$0xf] %vm1078, %v1073
          %1091 = vst.msk [vmem:[#allocation3 + $0x30] sm:$0xf] %vm1078, %v1074
          %1092 = vst.msk [vmem:[#allocation3 + $0x34] sm:$0xf] %vm1078, %v1075
          %1093 = vst.msk [vmem:[#allocation3 + $0x38] sm:$0xf] %vm1078, %v1076
          %1094 = vst.msk [vmem:[#allocation3 + $0x3c] sm:$0xf] %vm1078, %v1077
          %v1095 = vpack.c.bf16 %v1023, %v1023
          %v1096 = vpack.c.bf16 %v1025, %v1025
          %v1097 = vpack.c.bf16 %v1028, %v1028
          %v1098 = vpack.c.bf16 %v1030, %v1030
          %v1099 = vpack.c.bf16 %v1033, %v1033
          %v1100 = vpack.c.bf16 %v1035, %v1035
          %v1101 = vpack.c.bf16 %v1038, %v1038
          %v1102 = vpack.c.bf16 %v1040, %v1040
          %v1103 = vpack.c.bf16 %v1043, %v1043
          %v1104 = vpack.c.bf16 %v1045, %v1045
          %v1105 = vpack.c.bf16 %v1048, %v1048
          %v1106 = vpack.c.bf16 %v1050, %v1050
          %v1107 = vpack.c.bf16 %v1053, %v1053
          %v1108 = vpack.c.bf16 %v1055, %v1055
          %v1109 = vpack.c.bf16 %v1058, %v1058
          %v1110 = vpack.c.bf16 %v1060, %v1060
          %1127 = vrot.lane.b32.xlu0 %v1095, 32
          %v1128 = vpop.permute.xlu0 %1127
          %1129 = vrot.lane.b32.xlu0 %v1096, 32
          %v1130 = vpop.permute.xlu0 %1129
          %1131 = vrot.lane.b32.xlu0 %v1097, 32
          %v1132 = vpop.permute.xlu0 %1131
          %1133 = vrot.lane.b32.xlu0 %v1098, 32
          %v1134 = vpop.permute.xlu0 %1133
          %1135 = vrot.lane.b32.xlu0 %v1099, 32
          %v1136 = vpop.permute.xlu0 %1135
          %1137 = vrot.lane.b32.xlu0 %v1100, 32
          %v1138 = vpop.permute.xlu0 %1137
          %1139 = vrot.lane.b32.xlu0 %v1101, 32
          %v1140 = vpop.permute.xlu0 %1139
          %1141 = vrot.lane.b32.xlu0 %v1102, 32
          %v1142 = vpop.permute.xlu0 %1141
          %1143 = vrot.lane.b32.xlu0 %v1103, 32
          %v1144 = vpop.permute.xlu0 %1143
          %1145 = vrot.lane.b32.xlu0 %v1104, 32
          %v1146 = vpop.permute.xlu0 %1145
          %1147 = vrot.lane.b32.xlu0 %v1105, 32
          %v1148 = vpop.permute.xlu0 %1147
          %1149 = vrot.lane.b32.xlu0 %v1106, 32
          %v1150 = vpop.permute.xlu0 %1149
          %1151 = vrot.lane.b32.xlu0 %v1107, 32
          %v1152 = vpop.permute.xlu0 %1151
          %1153 = vrot.lane.b32.xlu0 %v1108, 32
          %v1154 = vpop.permute.xlu0 %1153
          %1155 = vrot.lane.b32.xlu0 %v1109, 32
          %v1156 = vpop.permute.xlu0 %1155
          %1157 = vrot.lane.b32.xlu0 %v1110, 32
          %v1158 = vpop.permute.xlu0 %1157
          %vm1175 = vcmask 519424
          %1176 = vst.msk [vmem:[#allocation3] sm:$0xf] %vm1175, %v1128
          %1177 = vst.msk [vmem:[#allocation3 + $0x4] sm:$0xf] %vm1175, %v1130
          %1178 = vst.msk [vmem:[#allocation3 + $0x8] sm:$0xf] %vm1175, %v1132
          %1179 = vst.msk [vmem:[#allocation3 + $0xc] sm:$0xf] %vm1175, %v1134
          %1180 = vst.msk [vmem:[#allocation3 + $0x10] sm:$0xf] %vm1175, %v1136
          %1181 = vst.msk [vmem:[#allocation3 + $0x14] sm:$0xf] %vm1175, %v1138
          %1182 = vst.msk [vmem:[#allocation3 + $0x18] sm:$0xf] %vm1175, %v1140
          %1183 = vst.msk [vmem:[#allocation3 + $0x1c] sm:$0xf] %vm1175, %v1142
          %1184 = vst.msk [vmem:[#allocation3 + $0x20] sm:$0xf] %vm1175, %v1144
          %1185 = vst.msk [vmem:[#allocation3 + $0x24] sm:$0xf] %vm1175, %v1146
          %1186 = vst.msk [vmem:[#allocation3 + $0x28] sm:$0xf] %vm1175, %v1148
          %1187 = vst.msk [vmem:[#allocation3 + $0x2c] sm:$0xf] %vm1175, %v1150
          %1188 = vst.msk [vmem:[#allocation3 + $0x30] sm:$0xf] %vm1175, %v1152
          %1189 = vst.msk [vmem:[#allocation3 + $0x34] sm:$0xf] %vm1175, %v1154
          %1190 = vst.msk [vmem:[#allocation3 + $0x38] sm:$0xf] %vm1175, %v1156
          %1191 = vst.msk [vmem:[#allocation3 + $0x3c] sm:$0xf] %vm1175, %v1158
          %v1192 = vld [vmem:[#allocation3] sm:$0xf]
          %v1193 = vld [vmem:[#allocation3 + $0x4] sm:$0xf]
          %v1194 = vld [vmem:[#allocation3 + $0x8] sm:$0xf]
          %v1195 = vld [vmem:[#allocation3 + $0xc] sm:$0xf]
          %v1196 = vld [vmem:[#allocation3 + $0x10] sm:$0xf]
          %v1197 = vld [vmem:[#allocation3 + $0x14] sm:$0xf]
          %v1198 = vld [vmem:[#allocation3 + $0x18] sm:$0xf]
          %v1199 = vld [vmem:[#allocation3 + $0x1c] sm:$0xf]
          %v1200 = vld [vmem:[#allocation3 + $0x20] sm:$0xf]
          %v1201 = vld [vmem:[#allocation3 + $0x24] sm:$0xf]
          %v1202 = vld [vmem:[#allocation3 + $0x28] sm:$0xf]
          %v1203 = vld [vmem:[#allocation3 + $0x2c] sm:$0xf]
          %v1204 = vld [vmem:[#allocation3 + $0x30] sm:$0xf]
          %v1205 = vld [vmem:[#allocation3 + $0x34] sm:$0xf]
          %v1206 = vld [vmem:[#allocation3 + $0x38] sm:$0xf]
          %v1207 = vld [vmem:[#allocation3 + $0x3c] sm:$0xf]
          %v1208 = vld [vmem:[%s6] sm:$0xf]
          %v1209 = vld [vmem:[%s6 + $0x4] sm:$0xf]
          %v1210 = vld [vmem:[%s6 + $0x8] sm:$0xf]
          %v1211 = vld [vmem:[%s6 + $0xc] sm:$0xf]
          %v1212 = vld [vmem:[%s6 + $0x10] sm:$0xf]
          %v1213 = vld [vmem:[%s6 + $0x14] sm:$0xf]
          %v1214 = vld [vmem:[%s6 + $0x18] sm:$0xf]
          %v1215 = vld [vmem:[%s6 + $0x1c] sm:$0xf]
          %v1216 = vld [vmem:[%s7] sm:$0x1]
          %v1218 = vperm.slane %v1216, 0
          %v1236 = vunpack.c.l.b16 %v1192
          %v1237 = vunpack.c.l.b16 %v1193
          %v1238 = vunpack.c.l.b16 %v1194
          %v1239 = vunpack.c.l.b16 %v1195
          %v1240 = vunpack.c.l.b16 %v1196
          %v1241 = vunpack.c.l.b16 %v1197
          %v1242 = vunpack.c.l.b16 %v1198
          %v1243 = vunpack.c.l.b16 %v1199
          %v1244 = vunpack.c.l.b16 %v1200
          %v1245 = vunpack.c.l.b16 %v1201
          %v1246 = vunpack.c.l.b16 %v1202
          %v1247 = vunpack.c.l.b16 %v1203
          %v1248 = vunpack.c.l.b16 %v1204
          %v1249 = vunpack.c.l.b16 %v1205
          %v1250 = vunpack.c.l.b16 %v1206
          %v1251 = vunpack.c.l.b16 %v1207
          %v1252 = vpack.c.b16 %v1237, %v1236
          %v1253 = vpack.c.b16 %v1239, %v1238
          %v1254 = vpack.c.b16 %v1241, %v1240
          %v1255 = vpack.c.b16 %v1243, %v1242
          %v1256 = vpack.c.b16 %v1245, %v1244
          %v1257 = vpack.c.b16 %v1247, %v1246
          %v1258 = vpack.c.b16 %v1249, %v1248
          %v1259 = vpack.c.b16 %v1251, %v1250
          %v1268 = vunpack.c.l.b16 %v1208
          %v1269 = vunpack.c.l.b16 %v1209
          %v1270 = vunpack.c.l.b16 %v1210
          %v1271 = vunpack.c.l.b16 %v1211
          %v1272 = vunpack.c.l.b16 %v1212
          %v1273 = vunpack.c.l.b16 %v1213
          %v1274 = vunpack.c.l.b16 %v1214
          %v1275 = vunpack.c.l.b16 %v1215
          %v1276 = vpack.c.b16 %v1269, %v1268
          %v1277 = vpack.c.b16 %v1271, %v1270
          %v1278 = vpack.c.b16 %v1273, %v1272
          %v1279 = vpack.c.b16 %v1275, %v1274
          %vm1284 = vcmask 523264
          %v1286 = vsel %vm1284, %v1252, 0
          %v1289 = vsel %vm1284, %v1253, 0
          %v1292 = vsel %vm1284, %v1254, 0
          %v1295 = vsel %vm1284, %v1255, 0
          %v1298 = vsel %vm1284, %v1256, 0
          %v1301 = vsel %vm1284, %v1257, 0
          %v1304 = vsel %vm1284, %v1258, 0
          %v1307 = vsel %vm1284, %v1259, 0
          %1309 = vmatpush.bf16.msra.mxu0 0
          %1310 = vmatpush.bf16.msra.mxu0 0
          %1311 = vmatpush.bf16.msra.mxu0 0
          %1312 = vmatpush.bf16.msra.mxu0 0
          %1313 = vmatpush.bf16.msra.mxu0 %v1279
          %1314 = vmatpush.bf16.msra.mxu0 %v1278
          %1315 = vmatpush.bf16.msra.mxu0 %v1277
          %1316 = vmatpush.bf16.msra.mxu0 %v1276
          %1317 = vmatmul.bf16.gmra.mxu0 %v1286
          %v1318 = vpop.f32.mrf.mxu0
          %v1319 = vadd.f32 %v1218, %v1318
          %v1320 = vpop.f32.mrf.mxu0
          %v1321 = vadd.f32 %v1218, %v1320
          %1322 = vmatmul.bf16.gmra.mxu0 %v1289
          %v1323 = vpop.f32.mrf.mxu0
          %v1324 = vadd.f32 %v1218, %v1323
          %v1325 = vpop.f32.mrf.mxu0
          %v1326 = vadd.f32 %v1218, %v1325
          %1327 = vmatmul.bf16.gmra.mxu0 %v1292
          %v1328 = vpop.f32.mrf.mxu0
          %v1329 = vadd.f32 %v1218, %v1328
          %v1330 = vpop.f32.mrf.mxu0
          %v1331 = vadd.f32 %v1218, %v1330
          %1332 = vmatmul.bf16.gmra.mxu0 %v1295
          %v1333 = vpop.f32.mrf.mxu0
          %v1334 = vadd.f32 %v1218, %v1333
          %v1335 = vpop.f32.mrf.mxu0
          %v1336 = vadd.f32 %v1218, %v1335
          %1337 = vmatmul.bf16.gmra.mxu0 %v1298
          %v1338 = vpop.f32.mrf.mxu0
          %v1339 = vadd.f32 %v1218, %v1338
          %v1340 = vpop.f32.mrf.mxu0
          %v1341 = vadd.f32 %v1218, %v1340
          %1342 = vmatmul.bf16.gmra.mxu0 %v1301
          %v1343 = vpop.f32.mrf.mxu0
          %v1344 = vadd.f32 %v1218, %v1343
          %v1345 = vpop.f32.mrf.mxu0
          %v1346 = vadd.f32 %v1218, %v1345
          %1347 = vmatmul.bf16.gmra.mxu0 %v1304
          %v1348 = vpop.f32.mrf.mxu0
          %v1349 = vadd.f32 %v1218, %v1348
          %v1350 = vpop.f32.mrf.mxu0
          %v1351 = vadd.f32 %v1218, %v1350
          %1352 = vmatmul.bf16.gmra.mxu0 %v1307
          %v1353 = vpop.f32.mrf.mxu0
          %v1354 = vadd.f32 %v1218, %v1353
          %v1355 = vpop.f32.mrf.mxu0
          %v1356 = vadd.f32 %v1218, %v1355
          %1357 = vdwg.mxu0
          %v1358 = vmax.f32 %v1319, 0.0
          %v1359 = vmax.f32 %v1321, 0.0
          %v1360 = vmax.f32 %v1324, 0.0
          %v1361 = vmax.f32 %v1326, 0.0
          %v1362 = vmax.f32 %v1329, 0.0
          %v1363 = vmax.f32 %v1331, 0.0
          %v1364 = vmax.f32 %v1334, 0.0
          %v1365 = vmax.f32 %v1336, 0.0
          %v1366 = vmax.f32 %v1339, 0.0
          %v1367 = vmax.f32 %v1341, 0.0
          %v1368 = vmax.f32 %v1344, 0.0
          %v1369 = vmax.f32 %v1346, 0.0
          %v1370 = vmax.f32 %v1349, 0.0
          %v1371 = vmax.f32 %v1351, 0.0
          %v1372 = vmax.f32 %v1354, 0.0
          %v1373 = vmax.f32 %v1356, 0.0
          %v1374 = vpack.c.bf16 %v1359, %v1358
          %v1375 = vpack.c.bf16 %v1361, %v1360
          %v1376 = vpack.c.bf16 %v1363, %v1362
          %v1377 = vpack.c.bf16 %v1365, %v1364
          %v1378 = vpack.c.bf16 %v1367, %v1366
          %v1379 = vpack.c.bf16 %v1369, %v1368
          %v1380 = vpack.c.bf16 %v1371, %v1370
          %v1381 = vpack.c.bf16 %v1373, %v1372
          %v1382 = vld [vmem:[%s8] sm:$0xf]
          %v1383 = vld [vmem:[%s8 + $0x4] sm:$0xf]
          %v1384 = vld [vmem:[%s8 + $0x8] sm:$0xf]
          %v1385 = vld [vmem:[%s8 + $0xc] sm:$0xf]
          %v1386 = vld [vmem:[%s8 + $0x10] sm:$0xf]
          %v1387 = vld [vmem:[%s8 + $0x14] sm:$0xf]
          %v1388 = vld [vmem:[%s8 + $0x18] sm:$0xf]
          %v1389 = vld [vmem:[%s8 + $0x1c] sm:$0xf]
          %v1390 = vld [vmem:[%s9] sm:$0x1]
          %v1392 = vperm.slane %v1390, 0
          %v1402 = vunpack.c.l.b16 %v1382
          %v1403 = vunpack.c.l.b16 %v1383
          %v1404 = vunpack.c.l.b16 %v1384
          %v1405 = vunpack.c.l.b16 %v1385
          %v1406 = vunpack.c.l.b16 %v1386
          %v1407 = vunpack.c.l.b16 %v1387
          %v1408 = vunpack.c.l.b16 %v1388
          %v1409 = vunpack.c.l.b16 %v1389
          %v1410 = vpack.c.b16 %v1403, %v1402
          %v1411 = vpack.c.b16 %v1405, %v1404
          %v1412 = vpack.c.b16 %v1407, %v1406
          %v1413 = vpack.c.b16 %v1409, %v1408
          %v1419 = vsel %vm1284, %v1374, 0
          %v1422 = vsel %vm1284, %v1375, 0
          %v1425 = vsel %vm1284, %v1376, 0
          %v1428 = vsel %vm1284, %v1377, 0
          %v1431 = vsel %vm1284, %v1378, 0
          %v1434 = vsel %vm1284, %v1379, 0
          %v1437 = vsel %vm1284, %v1380, 0
          %v1440 = vsel %vm1284, %v1381, 0
          %1442 = vmatpush.bf16.msra.mxu0 0
          %1443 = vmatpush.bf16.msra.mxu0 0
          %1444 = vmatpush.bf16.msra.mxu0 0
          %1445 = vmatpush.bf16.msra.mxu0 0
          %1446 = vmatpush.bf16.msra.mxu0 %v1413
          %1447 = vmatpush.bf16.msra.mxu0 %v1412
          %1448 = vmatpush.bf16.msra.mxu0 %v1411
          %1449 = vmatpush.bf16.msra.mxu0 %v1410
          %1450 = vmatmul.bf16.gmra.mxu0 %v1419
          %v1451 = vpop.f32.mrf.mxu0
          %v1452 = vadd.f32 %v1392, %v1451
          %v1453 = vpop.f32.mrf.mxu0
          %v1454 = vadd.f32 %v1392, %v1453
          %1455 = vmatmul.bf16.gmra.mxu0 %v1422
          %v1456 = vpop.f32.mrf.mxu0
          %v1457 = vadd.f32 %v1392, %v1456
          %v1458 = vpop.f32.mrf.mxu0
          %v1459 = vadd.f32 %v1392, %v1458
          %1460 = vmatmul.bf16.gmra.mxu0 %v1425
          %v1461 = vpop.f32.mrf.mxu0
          %v1462 = vadd.f32 %v1392, %v1461
          %v1463 = vpop.f32.mrf.mxu0
          %v1464 = vadd.f32 %v1392, %v1463
          %1465 = vmatmul.bf16.gmra.mxu0 %v1428
          %v1466 = vpop.f32.mrf.mxu0
          %v1467 = vadd.f32 %v1392, %v1466
          %v1468 = vpop.f32.mrf.mxu0
          %v1469 = vadd.f32 %v1392, %v1468
          %1470 = vmatmul.bf16.gmra.mxu0 %v1431
          %v1471 = vpop.f32.mrf.mxu0
          %v1472 = vadd.f32 %v1392, %v1471
          %v1473 = vpop.f32.mrf.mxu0
          %v1474 = vadd.f32 %v1392, %v1473
          %1475 = vmatmul.bf16.gmra.mxu0 %v1434
          %v1476 = vpop.f32.mrf.mxu0
          %v1477 = vadd.f32 %v1392, %v1476
          %v1478 = vpop.f32.mrf.mxu0
          %v1479 = vadd.f32 %v1392, %v1478
          %1480 = vmatmul.bf16.gmra.mxu0 %v1437
          %v1481 = vpop.f32.mrf.mxu0
          %v1482 = vadd.f32 %v1392, %v1481
          %v1483 = vpop.f32.mrf.mxu0
          %v1484 = vadd.f32 %v1392, %v1483
          %1485 = vmatmul.bf16.gmra.mxu0 %v1440
          %v1486 = vpop.f32.mrf.mxu0
          %v1487 = vadd.f32 %v1392, %v1486
          %v1488 = vpop.f32.mrf.mxu0
          %v1489 = vadd.f32 %v1392, %v1488
          %1490 = vdwg.mxu0
          %v1491 = vmax.f32 %v1452, 0.0
          %v1492 = vmax.f32 %v1454, 0.0
          %v1493 = vmax.f32 %v1457, 0.0
          %v1494 = vmax.f32 %v1459, 0.0
          %v1495 = vmax.f32 %v1462, 0.0
          %v1496 = vmax.f32 %v1464, 0.0
          %v1497 = vmax.f32 %v1467, 0.0
          %v1498 = vmax.f32 %v1469, 0.0
          %v1499 = vmax.f32 %v1472, 0.0
          %v1500 = vmax.f32 %v1474, 0.0
          %v1501 = vmax.f32 %v1477, 0.0
          %v1502 = vmax.f32 %v1479, 0.0
          %v1503 = vmax.f32 %v1482, 0.0
          %v1504 = vmax.f32 %v1484, 0.0
          %v1505 = vmax.f32 %v1487, 0.0
          %v1506 = vmax.f32 %v1489, 0.0
          %v1507 = vadd.f32 %v1491, %v904
          %v1508 = vadd.f32 %v1492, %v905
          %v1509 = vadd.f32 %v1493, %v906
          %v1510 = vadd.f32 %v1494, %v907
          %v1511 = vadd.f32 %v1495, %v908
          %v1512 = vadd.f32 %v1496, %v909
          %v1513 = vadd.f32 %v1497, %v910
          %v1514 = vadd.f32 %v1498, %v911
          %v1515 = vadd.f32 %v1499, %v912
          %v1516 = vadd.f32 %v1500, %v913
          %v1517 = vadd.f32 %v1501, %v914
          %v1518 = vadd.f32 %v1502, %v915
          %v1519 = vadd.f32 %v1503, %v916
          %v1520 = vadd.f32 %v1504, %v917
          %v1521 = vadd.f32 %v1505, %v918
          %v1522 = vadd.f32 %v1506, %v919
          %v1523 = vadd.f32 %v1507, %v1023
          %v1524 = vadd.f32 %v1508, %v1025
          %v1525 = vadd.f32 %v1509, %v1028
          %v1526 = vadd.f32 %v1510, %v1030
          %v1527 = vadd.f32 %v1511, %v1033
          %v1528 = vadd.f32 %v1512, %v1035
          %v1529 = vadd.f32 %v1513, %v1038
          %v1530 = vadd.f32 %v1514, %v1040
          %v1531 = vadd.f32 %v1515, %v1043
          %v1532 = vadd.f32 %v1516, %v1045
          %v1533 = vadd.f32 %v1517, %v1048
          %v1534 = vadd.f32 %v1518, %v1050
          %v1535 = vadd.f32 %v1519, %v1053
          %v1536 = vadd.f32 %v1520, %v1055
          %v1537 = vadd.f32 %v1521, %v1058
          %v1538 = vadd.f32 %v1522, %v1060
          %v1539 = vpack.c.bf16 %v1524, %v1523
          %v1540 = vpack.c.bf16 %v1526, %v1525
          %v1541 = vpack.c.bf16 %v1528, %v1527
          %v1542 = vpack.c.bf16 %v1530, %v1529
          %v1543 = vpack.c.bf16 %v1532, %v1531
          %v1544 = vpack.c.bf16 %v1534, %v1533
          %v1545 = vpack.c.bf16 %v1536, %v1535
          %v1546 = vpack.c.bf16 %v1538, %v1537
          %v1547 = vld [vmem:[%s10] sm:$0xf]
          %v1548 = vld [vmem:[%s10 + $0x4] sm:$0xf]
          %v1549 = vld [vmem:[%s10 + $0x8] sm:$0xf]
          %v1550 = vld [vmem:[%s10 + $0xc] sm:$0xf]
          %v1551 = vld [vmem:[%s11] sm:$0x1]
          %v1553 = vperm.slane %v1551, 0
          %v1559 = vunpack.c.l.b16 %v1547
          %v1560 = vunpack.c.l.b16 %v1548
          %v1561 = vunpack.c.l.b16 %v1549
          %v1562 = vunpack.c.l.b16 %v1550
          %v1563 = vpack.c.b16 %v1560, %v1559
          %v1564 = vpack.c.b16 %v1562, %v1561
          %v1568 = vsel %vm863, %v1539, 0
          %v1571 = vsel %vm863, %v1540, 0
          %v1574 = vsel %vm863, %v1541, 0
          %v1577 = vsel %vm863, %v1542, 0
          %v1580 = vsel %vm863, %v1543, 0
          %v1583 = vsel %vm863, %v1544, 0
          %v1586 = vsel %vm863, %v1545, 0
          %v1589 = vsel %vm863, %v1546, 0
          %1591 = vmatpush.bf16.msra.mxu0 0
          %1592 = vmatpush.bf16.msra.mxu0 0
          %1593 = vmatpush.bf16.msra.mxu0 0
          %1594 = vmatpush.bf16.msra.mxu0 0
          %1595 = vmatpush.bf16.msra.mxu0 0
          %1596 = vmatpush.bf16.msra.mxu0 0
          %1597 = vmatpush.bf16.msra.mxu0 %v1564
          %1598 = vmatpush.bf16.msra.mxu0 %v1563
          %1599 = vmatmul.bf16.gmra.mxu0 %v1568
          %v1600 = vpop.f32.mrf.mxu0
          %v1601 = vadd.f32 %v1553, %v1600
          %v1602 = vpop.f32.mrf.mxu0
          %v1603 = vadd.f32 %v1553, %v1602
          %1604 = vmatmul.bf16.gmra.mxu0 %v1571
          %v1605 = vpop.f32.mrf.mxu0
          %v1606 = vadd.f32 %v1553, %v1605
          %v1607 = vpop.f32.mrf.mxu0
          %v1608 = vadd.f32 %v1553, %v1607
          %1609 = vmatmul.bf16.gmra.mxu0 %v1574
          %v1610 = vpop.f32.mrf.mxu0
          %v1611 = vadd.f32 %v1553, %v1610
          %v1612 = vpop.f32.mrf.mxu0
          %v1613 = vadd.f32 %v1553, %v1612
          %1614 = vmatmul.bf16.gmra.mxu0 %v1577
          %v1615 = vpop.f32.mrf.mxu0
          %v1616 = vadd.f32 %v1553, %v1615
          %v1617 = vpop.f32.mrf.mxu0
          %v1618 = vadd.f32 %v1553, %v1617
          %1619 = vmatmul.bf16.gmra.mxu0 %v1580
          %v1620 = vpop.f32.mrf.mxu0
          %v1621 = vadd.f32 %v1553, %v1620
          %v1622 = vpop.f32.mrf.mxu0
          %v1623 = vadd.f32 %v1553, %v1622
          %1624 = vmatmul.bf16.gmra.mxu0 %v1583
          %v1625 = vpop.f32.mrf.mxu0
          %v1626 = vadd.f32 %v1553, %v1625
          %v1627 = vpop.f32.mrf.mxu0
          %v1628 = vadd.f32 %v1553, %v1627
          %1629 = vmatmul.bf16.gmra.mxu0 %v1586
          %v1630 = vpop.f32.mrf.mxu0
          %v1631 = vadd.f32 %v1553, %v1630
          %v1632 = vpop.f32.mrf.mxu0
          %v1633 = vadd.f32 %v1553, %v1632
          %1634 = vmatmul.bf16.gmra.mxu0 %v1589
          %v1635 = vpop.f32.mrf.mxu0
          %v1636 = vadd.f32 %v1553, %v1635
          %v1637 = vpop.f32.mrf.mxu0
          %v1638 = vadd.f32 %v1553, %v1637
          %1639 = vdwg.mxu0
          %v1640 = vmax.f32 %v1601, 0.0
          %v1641 = vmax.f32 %v1603, 0.0
          %v1642 = vmax.f32 %v1606, 0.0
          %v1643 = vmax.f32 %v1608, 0.0
          %v1644 = vmax.f32 %v1611, 0.0
          %v1645 = vmax.f32 %v1613, 0.0
          %v1646 = vmax.f32 %v1616, 0.0
          %v1647 = vmax.f32 %v1618, 0.0
          %v1648 = vmax.f32 %v1621, 0.0
          %v1649 = vmax.f32 %v1623, 0.0
          %v1650 = vmax.f32 %v1626, 0.0
          %v1651 = vmax.f32 %v1628, 0.0
          %v1652 = vmax.f32 %v1631, 0.0
          %v1653 = vmax.f32 %v1633, 0.0
          %v1654 = vmax.f32 %v1636, 0.0
          %v1655 = vmax.f32 %v1638, 0.0
          %v1656 = vpack.c.bf16 %v1641, %v1640
          %v1657 = vpack.c.bf16 %v1643, %v1642
          %v1658 = vpack.c.bf16 %v1645, %v1644
          %v1659 = vpack.c.bf16 %v1647, %v1646
          %v1660 = vpack.c.bf16 %v1649, %v1648
          %v1661 = vpack.c.bf16 %v1651, %v1650
          %v1662 = vpack.c.bf16 %v1653, %v1652
          %v1663 = vpack.c.bf16 %v1655, %v1654
          %v1664 = vld [vmem:[%s12] sm:$0xf]
          %v1665 = vld [vmem:[%s12 + $0x4] sm:$0xf]
          %v1666 = vld [vmem:[%s12 + $0x8] sm:$0xf]
          %v1667 = vld [vmem:[%s12 + $0xc] sm:$0xf]
          %v1668 = vld [vmem:[%s13] sm:$0x1]
          %v1670 = vperm.slane %v1668, 0
          %v1676 = vunpack.c.l.b16 %v1664
          %v1677 = vunpack.c.l.b16 %v1665
          %v1678 = vunpack.c.l.b16 %v1666
          %v1679 = vunpack.c.l.b16 %v1667
          %v1680 = vpack.c.b16 %v1677, %v1676
          %v1681 = vpack.c.b16 %v1679, %v1678
          %v1685 = vsel %vm863, %v1656, 0
          %v1688 = vsel %vm863, %v1657, 0
          %v1691 = vsel %vm863, %v1658, 0
          %v1694 = vsel %vm863, %v1659, 0
          %v1697 = vsel %vm863, %v1660, 0
          %v1700 = vsel %vm863, %v1661, 0
          %v1703 = vsel %vm863, %v1662, 0
          %v1706 = vsel %vm863, %v1663, 0
          %1708 = vmatpush.bf16.msra.mxu0 0
          %1709 = vmatpush.bf16.msra.mxu0 0
          %1710 = vmatpush.bf16.msra.mxu0 0
          %1711 = vmatpush.bf16.msra.mxu0 0
          %1712 = vmatpush.bf16.msra.mxu0 0
          %1713 = vmatpush.bf16.msra.mxu0 0
          %1714 = vmatpush.bf16.msra.mxu0 %v1681
          %1715 = vmatpush.bf16.msra.mxu0 %v1680
          %1716 = vmatmul.bf16.gmra.mxu0 %v1685
          %v1717 = vpop.f32.mrf.mxu0
          %v1718 = vadd.f32 %v1670, %v1717
          %v1719 = vpop.f32.mrf.mxu0
          %v1720 = vadd.f32 %v1670, %v1719
          %1721 = vmatmul.bf16.gmra.mxu0 %v1688
          %v1722 = vpop.f32.mrf.mxu0
          %v1723 = vadd.f32 %v1670, %v1722
          %v1724 = vpop.f32.mrf.mxu0
          %v1725 = vadd.f32 %v1670, %v1724
          %1726 = vmatmul.bf16.gmra.mxu0 %v1691
          %v1727 = vpop.f32.mrf.mxu0
          %v1728 = vadd.f32 %v1670, %v1727
          %v1729 = vpop.f32.mrf.mxu0
          %v1730 = vadd.f32 %v1670, %v1729
          %1731 = vmatmul.bf16.gmra.mxu0 %v1694
          %v1732 = vpop.f32.mrf.mxu0
          %v1733 = vadd.f32 %v1670, %v1732
          %v1734 = vpop.f32.mrf.mxu0
          %v1735 = vadd.f32 %v1670, %v1734
          %1736 = vmatmul.bf16.gmra.mxu0 %v1697
          %v1737 = vpop.f32.mrf.mxu0
          %v1738 = vadd.f32 %v1670, %v1737
          %v1739 = vpop.f32.mrf.mxu0
          %v1740 = vadd.f32 %v1670, %v1739
          %1741 = vmatmul.bf16.gmra.mxu0 %v1700
          %v1742 = vpop.f32.mrf.mxu0
          %v1743 = vadd.f32 %v1670, %v1742
          %v1744 = vpop.f32.mrf.mxu0
          %v1745 = vadd.f32 %v1670, %v1744
          %1746 = vmatmul.bf16.gmra.mxu0 %v1703
          %v1747 = vpop.f32.mrf.mxu0
          %v1748 = vadd.f32 %v1670, %v1747
          %v1749 = vpop.f32.mrf.mxu0
          %v1750 = vadd.f32 %v1670, %v1749
          %1751 = vmatmul.bf16.gmra.mxu0 %v1706
          %v1752 = vpop.f32.mrf.mxu0
          %v1753 = vadd.f32 %v1670, %v1752
          %v1754 = vpop.f32.mrf.mxu0
          %v1755 = vadd.f32 %v1670, %v1754
          %1756 = vdwg.mxu0
          %1757 = vmax.xlane.f32.xlu0 %v1718
          %v1758 = vpop.xlane.xlu0 %1757
          %1759 = vmax.xlane.f32.xlu0 %v1720
          %v1760 = vpop.xlane.xlu0 %1759
          %1761 = vmax.xlane.f32.xlu0 %v1723
          %v1762 = vpop.xlane.xlu0 %1761
          %1763 = vmax.xlane.f32.xlu0 %v1725
          %v1764 = vpop.xlane.xlu0 %1763
          %1765 = vmax.xlane.f32.xlu0 %v1728
          %v1766 = vpop.xlane.xlu0 %1765
          %1767 = vmax.xlane.f32.xlu0 %v1730
          %v1768 = vpop.xlane.xlu0 %1767
          %1769 = vmax.xlane.f32.xlu0 %v1733
          %v1770 = vpop.xlane.xlu0 %1769
          %1771 = vmax.xlane.f32.xlu0 %v1735
          %v1772 = vpop.xlane.xlu0 %1771
          %1773 = vmax.xlane.f32.xlu0 %v1738
          %v1774 = vpop.xlane.xlu0 %1773
          %1775 = vmax.xlane.f32.xlu0 %v1740
          %v1776 = vpop.xlane.xlu0 %1775
          %1777 = vmax.xlane.f32.xlu0 %v1743
          %v1778 = vpop.xlane.xlu0 %1777
          %1779 = vmax.xlane.f32.xlu0 %v1745
          %v1780 = vpop.xlane.xlu0 %1779
          %1781 = vmax.xlane.f32.xlu0 %v1748
          %v1782 = vpop.xlane.xlu0 %1781
          %1783 = vmax.xlane.f32.xlu0 %v1750
          %v1784 = vpop.xlane.xlu0 %1783
          %1785 = vmax.xlane.f32.xlu0 %v1753
          %v1786 = vpop.xlane.xlu0 %1785
          %1787 = vmax.xlane.f32.xlu0 %v1755
          %v1788 = vpop.xlane.xlu0 %1787
          %v1789 = vsub.f32 %v1718, %v1758
          %v1790 = vsub.f32 %v1720, %v1760
          %v1791 = vsub.f32 %v1723, %v1762
          %v1792 = vsub.f32 %v1725, %v1764
          %v1793 = vsub.f32 %v1728, %v1766
          %v1794 = vsub.f32 %v1730, %v1768
          %v1795 = vsub.f32 %v1733, %v1770
          %v1796 = vsub.f32 %v1735, %v1772
          %v1797 = vsub.f32 %v1738, %v1774
          %v1798 = vsub.f32 %v1740, %v1776
          %v1799 = vsub.f32 %v1743, %v1778
          %v1800 = vsub.f32 %v1745, %v1780
          %v1801 = vsub.f32 %v1748, %v1782
          %v1802 = vsub.f32 %v1750, %v1784
          %v1803 = vsub.f32 %v1753, %v1786
          %v1804 = vsub.f32 %v1755, %v1788
          %v1805 = vmul.f32 %v1789, 1.442695
          %v1806 = vpow.pop %v1805
          %v1807 = vmul.f32 %v1790, 1.442695
          %v1808 = vpow.pop %v1807
          %v1809 = vmul.f32 %v1791, 1.442695
          %v1810 = vpow.pop %v1809
          %v1811 = vmul.f32 %v1792, 1.442695
          %v1812 = vpow.pop %v1811
          %v1813 = vmul.f32 %v1793, 1.442695
          %v1814 = vpow.pop %v1813
          %v1815 = vmul.f32 %v1794, 1.442695
          %v1816 = vpow.pop %v1815
          %v1817 = vmul.f32 %v1795, 1.442695
          %v1818 = vpow.pop %v1817
          %v1819 = vmul.f32 %v1796, 1.442695
          %v1820 = vpow.pop %v1819
          %v1821 = vmul.f32 %v1797, 1.442695
          %v1822 = vpow.pop %v1821
          %v1823 = vmul.f32 %v1798, 1.442695
          %v1824 = vpow.pop %v1823
          %v1825 = vmul.f32 %v1799, 1.442695
          %v1826 = vpow.pop %v1825
          %v1827 = vmul.f32 %v1800, 1.442695
          %v1828 = vpow.pop %v1827
          %v1829 = vmul.f32 %v1801, 1.442695
          %v1830 = vpow.pop %v1829
          %v1831 = vmul.f32 %v1802, 1.442695
          %v1832 = vpow.pop %v1831
          %v1833 = vmul.f32 %v1803, 1.442695
          %v1834 = vpow.pop %v1833
          %v1835 = vmul.f32 %v1804, 1.442695
          %v1836 = vpow.pop %v1835
          %1837 = vadd.xlane.f32.xlu0 %v1806
          %v1838 = vpop.xlane.xlu0 %1837
          %1839 = vadd.xlane.f32.xlu0 %v1808
          %v1840 = vpop.xlane.xlu0 %1839
          %1841 = vadd.xlane.f32.xlu0 %v1810
          %v1842 = vpop.xlane.xlu0 %1841
          %1843 = vadd.xlane.f32.xlu0 %v1812
          %v1844 = vpop.xlane.xlu0 %1843
          %1845 = vadd.xlane.f32.xlu0 %v1814
          %v1846 = vpop.xlane.xlu0 %1845
          %1847 = vadd.xlane.f32.xlu0 %v1816
          %v1848 = vpop.xlane.xlu0 %1847
          %1849 = vadd.xlane.f32.xlu0 %v1818
          %v1850 = vpop.xlane.xlu0 %1849
          %1851 = vadd.xlane.f32.xlu0 %v1820
          %v1852 = vpop.xlane.xlu0 %1851
          %1853 = vadd.xlane.f32.xlu0 %v1822
          %v1854 = vpop.xlane.xlu0 %1853
          %1855 = vadd.xlane.f32.xlu0 %v1824
          %v1856 = vpop.xlane.xlu0 %1855
          %1857 = vadd.xlane.f32.xlu0 %v1826
          %v1858 = vpop.xlane.xlu0 %1857
          %1859 = vadd.xlane.f32.xlu0 %v1828
          %v1860 = vpop.xlane.xlu0 %1859
          %1861 = vadd.xlane.f32.xlu0 %v1830
          %v1862 = vpop.xlane.xlu0 %1861
          %1863 = vadd.xlane.f32.xlu0 %v1832
          %v1864 = vpop.xlane.xlu0 %1863
          %1865 = vadd.xlane.f32.xlu0 %v1834
          %v1866 = vpop.xlane.xlu0 %1865
          %1867 = vadd.xlane.f32.xlu0 %v1836
          %v1868 = vpop.xlane.xlu0 %1867
          %v1869 = vlog2.pop %v1838
          %v1870 = vmul.f32 %v1869, 0.6931472
          %v1871 = vlog2.pop %v1840
          %v1872 = vmul.f32 %v1871, 0.6931472
          %v1873 = vlog2.pop %v1842
          %v1874 = vmul.f32 %v1873, 0.6931472
          %v1875 = vlog2.pop %v1844
          %v1876 = vmul.f32 %v1875, 0.6931472
          %v1877 = vlog2.pop %v1846
          %v1878 = vmul.f32 %v1877, 0.6931472
          %v1879 = vlog2.pop %v1848
          %v1880 = vmul.f32 %v1879, 0.6931472
          %v1881 = vlog2.pop %v1850
          %v1882 = vmul.f32 %v1881, 0.6931472
          %v1883 = vlog2.pop %v1852
          %v1884 = vmul.f32 %v1883, 0.6931472
          %v1885 = vlog2.pop %v1854
          %v1886 = vmul.f32 %v1885, 0.6931472
          %v1887 = vlog2.pop %v1856
          %v1888 = vmul.f32 %v1887, 0.6931472
          %v1889 = vlog2.pop %v1858
          %v1890 = vmul.f32 %v1889, 0.6931472
          %v1891 = vlog2.pop %v1860
          %v1892 = vmul.f32 %v1891, 0.6931472
          %v1893 = vlog2.pop %v1862
          %v1894 = vmul.f32 %v1893, 0.6931472
          %v1895 = vlog2.pop %v1864
          %v1896 = vmul.f32 %v1895, 0.6931472
          %v1897 = vlog2.pop %v1866
          %v1898 = vmul.f32 %v1897, 0.6931472
          %v1899 = vlog2.pop %v1868
          %v1900 = vmul.f32 %v1899, 0.6931472
          %v1901 = vsub.f32 %v1789, %v1870
          %v1902 = vsub.f32 %v1790, %v1872
          %v1903 = vsub.f32 %v1791, %v1874
          %v1904 = vsub.f32 %v1792, %v1876
          %v1905 = vsub.f32 %v1793, %v1878
          %v1906 = vsub.f32 %v1794, %v1880
          %v1907 = vsub.f32 %v1795, %v1882
          %v1908 = vsub.f32 %v1796, %v1884
          %v1909 = vsub.f32 %v1797, %v1886
          %v1910 = vsub.f32 %v1798, %v1888
          %v1911 = vsub.f32 %v1799, %v1890
          %v1912 = vsub.f32 %v1800, %v1892
          %v1913 = vsub.f32 %v1801, %v1894
          %v1914 = vsub.f32 %v1802, %v1896
          %v1915 = vsub.f32 %v1803, %v1898
          %v1916 = vsub.f32 %v1804, %v1900
          %1917 = vst [vmem:[%s617] sm:$0xff] %v1901
          %1918 = vst [vmem:[%s617 + $0x8] sm:$0xff] %v1902
          %1919 = vst [vmem:[%s617 + $0x10] sm:$0xff] %v1903
          %1920 = vst [vmem:[%s617 + $0x18] sm:$0xff] %v1904
          %1921 = vst [vmem:[%s617 + $0x20] sm:$0xff] %v1905
          %1922 = vst [vmem:[%s617 + $0x28] sm:$0xff] %v1906
          %1923 = vst [vmem:[%s617 + $0x30] sm:$0xff] %v1907
          %1924 = vst [vmem:[%s617 + $0x38] sm:$0xff] %v1908
          %1925 = vst [vmem:[%s617 + $0x40] sm:$0xff] %v1909
          %1926 = vst [vmem:[%s617 + $0x48] sm:$0xff] %v1910
          %1927 = vst [vmem:[%s617 + $0x50] sm:$0xff] %v1911
          %1928 = vst [vmem:[%s617 + $0x58] sm:$0xff] %v1912
          %1929 = vst [vmem:[%s617 + $0x60] sm:$0xff] %v1913
          %1930 = vst [vmem:[%s617 + $0x68] sm:$0xff] %v1914
          %1931 = vst [vmem:[%s617 + $0x70] sm:$0xff] %v1915
          %1932 = vst [vmem:[%s617 + $0x78] sm:$0xff] %v1916
        $region125: #{tpu_custom_call.1} parent=112 // pred_fallthru
          _
        %s1933 = sand.u32 %s359, 1
        %s1934 = scalar_lea.sflag [#allocation6], %s1933
        %s1935 = sand.u32 %s359, 1
        %s1936 = smul.addr %s1935, 128
        %s1937 = scalar_lea.vmem [#allocation5], %s1936
        // Predicated region
        $region126: #{tpu_custom_call.1} parent=112 // pred_check
          %p1938 = pneg %p369
        $region127: #{tpu_custom_call.1} parent=112 // pred_check_branch
          %1940 = sbr.rel (%p1938) target = $region129
        $region128: #{tpu_custom_call.1} parent=112 // pred_region
          %s1941 = smul.u32 16, %s32
          %1943 = vsyncadd %s1934, 0
          %s1944 = smul.addr %s1941, 8
          %s1945 = scalar_lea.hbm %s14, %s1944
          %s1946 = sshll.u32 %s1937, 4
          %s1947 = int_to_ptr.vmem [resolvable:$true] %s1946
          %s1948 = sshll.u32 %s1945, 4
          %s1949 = int_to_ptr.hbm [resolvable:$true] %s1948
          %1954 = dma.vmem_to_hbm [thread:$0]  %s1947, 2048, %s1949, %s1934, 128, 128, 8
        $region129: #{tpu_custom_call.1} parent=112 // pred_fallthru
          _
      $region113: #{tpu_custom_call.1} parent=5 // pred_fallthru
        _
      %p1955 = scmp.le.s32.totalorder 2, %s23
      // Predicated region
      $region130: #{tpu_custom_call.1} parent=5 // pred_check
        %p1956 = pneg %p1955
      $region131: #{tpu_custom_call.1} parent=5 // pred_check_branch
        %1958 = sbr.rel (%p1956) target = $region133
      $region132: #{tpu_custom_call.1} parent=5 // pred_region
        %s1959 = ssub.s32 %s23, 2
        // Predicated region
        $region134: #{tpu_custom_call.1} parent=132 // pred_check
          %p1960 = pneg %p375
        $region135: #{tpu_custom_call.1} parent=132 // pred_check_branch
          %1962 = sbr.rel (%p1960) target = $region137
        $region136: #{tpu_custom_call.1} parent=132 // pred_region
          %s1963 = sand.u32 %s360, 1
          %s1964 = scalar_lea.sflag [#allocation6], %s1963
          %s1965 = sand.u32 %s360, 1
          %s1966 = smul.addr %s1965, 128
          %s1967 = scalar_lea.vmem [#allocation5], %s1966
          %1969 = dma.done %s1964, 2048
        $region137: #{tpu_custom_call.1} parent=132 // pred_fallthru
          _
      $region133: #{tpu_custom_call.1} parent=5 // pred_fallthru
        _
    $region6: #{tpu_custom_call.1} parent=1 // loop_footer
      %s27 = sadd.s32 1, %s23
    $region7: #{tpu_custom_call.1} parent=1 // loop_footer_branch
      %22 = sbr.rel target = $region3
    $region8: #{tpu_custom_call.1} parent=1 // loop_exit
      _
    %1970 = vsyncpa [#allocation6], 1
    %s1971 = scalar_lea.sflag [#allocation6], 1
    %1972 = vsyncpa %s1971, 1

</llo_original>
